<compile_context>
chip_gen: v6e
topology: v6e:2x2x1
jax: 0.10.0
libtpu: 0.0.40
codegen_flags: <defaults>
</compile_context>

<pallas_src>
import functools
import math

import jax
import jax.numpy as jnp
from jax import lax
from jax.experimental import pallas as pl
from jax.experimental.pallas import tpu as pltpu


def _fourier_loss_rmax_kernel(feat_ref, ind_ref, mask_ref, tgt_t_ref, m_t_ref, out_ref):
    # feat_ref : VMEM (1, C, HW)  f32   -- NCHW feature map, flattened spatial (lane-dense)
    # ind_ref  : VMEM (1, 1, K)   i32   -- gather indices into HW
    # mask_ref : VMEM (1, 1, K)   f32
    # tgt_t_ref: VMEM (1, C, K)   f32   -- target fourier coeffs, transposed (lane-dense K)
    # m_t_ref  : VMEM (ns, C)     f32   -- fourier2poly "x" matrix, transposed
    # out_ref  : VMEM (1, 1, 128) f32   -- lane 0: smooth-L1 partial sum, lane 1: mask sum
    _, c_dim, hw = feat_ref.shape
    k_dim = ind_ref.shape[-1]
    ns = m_t_ref.shape[0]
    hp = lax.Precision.HIGHEST

    ind_row = ind_ref[0]        # (1, K) int32
    mask_row = mask_ref[0]      # (1, K) f32

    # ---- gather via one-hot MXU contraction, chunked over HW (bounded VMEM) ----
    if hw > 2048 and hw % 2048 == 0:
        chunk = 2048
    else:
        chunk = hw
    pred_t = jnp.zeros((c_dim, k_dim), jnp.float32)
    for c0 in range(0, hw, chunk):                               # static, unrolled
        fblk = feat_ref[0, :, pl.ds(c0, chunk)]                  # (C, chunk)
        iota = lax.broadcasted_iota(jnp.int32, (chunk, k_dim), 0) + c0
        onehot = (iota == ind_row).astype(jnp.float32)           # (chunk, K)
        pred_t = pred_t + jnp.dot(fblk, onehot,
                                  preferred_element_type=jnp.float32,
                                  precision=hp)                  # (C, K)

    # ---- fourier2poly (x component), transposed: ft_T(ns,K) = M_T(ns,C) @ coeff_T(C,K) ----
    m_t = m_t_ref[...]
    ft_pre_t = jnp.dot(m_t, pred_t, preferred_element_type=jnp.float32, precision=hp)
    ft_tgt_t = jnp.dot(m_t, tgt_t_ref[0], preferred_element_type=jnp.float32, precision=hp)

    # ---- masked smooth-L1 (beta = 1), sum reduction ----
    # (a*m - b*m) == (a - b)*m  -> single multiply (mask hoisted).
    d = (ft_pre_t - ft_tgt_t) * mask_row                         # (ns, K) * (1, K)
    ad = jnp.abs(d)
    sl1 = jnp.where(ad < 1.0, 0.5 * ad * ad, ad - 0.5)
    partial = jnp.sum(sl1)
    mask_sum = jnp.sum(mask_row) * jnp.float32(ns)               # sum of the expanded mask

    lane = lax.broadcasted_iota(jnp.int32, (1, 1, 128), 2)
    out_ref[...] = jnp.where(lane == 0, partial,
                             jnp.where(lane == 1, mask_sum, 0.0))


def fourier_loss_rmax(output, mask, ind, target, fourier_degree, num_sample):
    """output: (B, C, H, W), mask: (B, K), ind: (B, K), target: (B, K, C);
    C must equal 2*(2*fourier_degree+1)."""
    B, C, H, W = output.shape
    K = ind.shape[1]
    HW = H * W
    F_ = 2 * fourier_degree + 1
    assert C == 2 * F_, "channel dim must equal 2*(2*fourier_degree+1)"

    feat = output.reshape(B, C, HW).astype(jnp.float32)          # NCHW kept -- no transpose
    ind3 = ind.astype(jnp.int32).reshape(B, 1, K)
    mask3 = mask.astype(jnp.float32).reshape(B, 1, K)
    tgt_t = jnp.transpose(target.astype(jnp.float32), (0, 2, 1))  # (B, C, K) -- tiny

    # fourier2poly x-component as one matrix:  x = coeff @ [cos(T); -sin(T)]
    k_vect = jnp.arange(-fourier_degree, fourier_degree + 1, dtype=jnp.float32)[:, None]
    i_vect = jnp.arange(num_sample, dtype=jnp.float32)[None, :]
    t_mat = (2.0 * math.pi / num_sample) * (k_vect * i_vect)      # (F_, ns)
    m_t = jnp.concatenate([jnp.cos(t_mat), -jnp.sin(t_mat)], axis=0).T  # (ns, C)

    out = pl.pallas_call(
        _fourier_loss_rmax_kernel,
        out_shape=jax.ShapeDtypeStruct((B, 1, 128), jnp.float32),
        grid_spec=pltpu.PrefetchScalarGridSpec(
            num_scalar_prefetch=0,
            grid=(B,),
            in_specs=[
                pl.BlockSpec((1, C, HW), lambda b: (b, 0, 0)),          # feature map slab
                pl.BlockSpec((1, 1, K), lambda b: (b, 0, 0)),           # ind
                pl.BlockSpec((1, 1, K), lambda b: (b, 0, 0)),           # mask
                pl.BlockSpec((1, C, K), lambda b: (b, 0, 0)),           # target^T
                pl.BlockSpec((num_sample, C), lambda b: (0, 0)),        # fourier matrix
            ],
            out_specs=pl.BlockSpec((1, 1, 128), lambda b: (b, 0, 0)),
        ),
        compiler_params=pltpu.CompilerParams(
            dimension_semantics=("parallel",)),                   # independent per-batch partials
    )(feat, ind3, mask3, tgt_t, m_t)

    loss_sum = jnp.sum(out[:, 0, 0])
    mask_total = jnp.sum(out[:, 0, 1])
    return loss_sum / (mask_total + 1e-4)


def _fourier_loss_rmax_reference(output, mask, ind, target, fourier_degree, num_sample):
    """Pure-JAX reference mirroring the PyTorch module."""
    B, C, H, W = output.shape
    feat = jnp.transpose(output, (0, 2, 3, 1)).reshape(B, H * W, C)
    pred = jnp.take_along_axis(feat, ind[:, :, None].astype(jnp.int32), axis=1)  # (B,K,C)

    hp = lax.Precision.HIGHEST
    F_ = 2 * fourier_degree + 1
    k_vect = jnp.arange(-fourier_degree, fourier_degree + 1, dtype=jnp.float32)[:, None]
    i_vect = jnp.arange(num_sample, dtype=jnp.float32)[None, :]
    t_mat = (2.0 * math.pi / num_sample) * (k_vect * i_vect)

    def fourier2poly_x(coeff):
        coeff = coeff.reshape(-1, 2 * F_)
        real, imag = coeff[:, :F_], coeff[:, F_:]
        return (jnp.matmul(real, jnp.cos(t_mat), precision=hp)
                - jnp.matmul(imag, jnp.sin(t_mat), precision=hp))

    ft_x = fourier2poly_x(target.astype(jnp.float32))
    ft_pre = fourier2poly_x(pred.astype(jnp.float32))
    m = jnp.broadcast_to(mask.astype(jnp.float32).reshape(-1, 1), ft_x.shape)
    d = ft_pre * m - ft_x * m
    ad = jnp.abs(d)
    sl1 = jnp.where(ad < 1.0, 0.5 * ad * ad, ad - 0.5)            # smooth_l1, sum reduction
    return jnp.sum(sl1) / (jnp.sum(m) + 1e-4)


if __name__ == "__main__":
    key = jax.random.PRNGKey(0)
    k1, k2, k3, k4 = jax.random.split(key, 4)

    FD, NS = 2, 32                      # fourier degree, number of contour samples
    B, K, H, W = 2, 8, 16, 16
    C = 2 * (2 * FD + 1)                # 10 fourier-coefficient channels

    output = jax.random.normal(k1, (B, C, H, W), dtype=jnp.float32)
    ind = jax.random.randint(k2, (B, K), 0, H * W, dtype=jnp.int32)
    mask = (jax.random.uniform(k3, (B, K)) > 0.3).astype(jnp.float32)
    target = jax.random.normal(k4, (B, K, C), dtype=jnp.float32)

    loss = jax.block_until_ready(fourier_loss_rmax(output, mask, ind, target, FD, NS))
    ref = jax.block_until_ready(_fourier_loss_rmax_reference(output, mask, ind, target, FD, NS))

    # Tolerance allows for MXU f32 pass configuration differences between the in-kernel
    # and XLA reference matmuls; semantic bugs would be orders of magnitude larger.
    assert jnp.allclose(loss, ref, rtol=2e-3, atol=2e-3), (loss, ref)
    print("KERNEL_OK")
</pallas_src>

<mosaic_0001>
module attributes {stable_mosaic.version = 11 : i64} {
  func.func @_fourier_loss_rmax_kernel(%arg0: i32, %arg1: memref<1x10x256xf32, #tpu.memory_space<vmem>>, %arg2: memref<1x1x8xi32, #tpu.memory_space<vmem>>, %arg3: memref<1x1x8xf32, #tpu.memory_space<vmem>>, %arg4: memref<1x10x8xf32, #tpu.memory_space<vmem>>, %arg5: memref<32x10xf32, #tpu.memory_space<vmem>>, %arg6: memref<1x1x128xf32, #tpu.memory_space<vmem>>) attributes {dimension_semantics = [#tpu.dimension_semantics<parallel>], iteration_bounds = array<i64: 2>, scalar_prefetch = 0 : i64, scratch_operands = 0 : i64, tpu.core_type = #tpu.core_type<tc>, window_params = [{transform_indices = @transform_0, window_bounds = array<i64: 1, 10, 256>}, {transform_indices = @transform_1, window_bounds = array<i64: 1, 1, 8>}, {transform_indices = @transform_2, window_bounds = array<i64: 1, 1, 8>}, {transform_indices = @transform_3, window_bounds = array<i64: 1, 10, 8>}, {pipeline_mode = #tpu.pipeline_mode<synchronous>, transform_indices = @transform_4, window_bounds = array<i64: 32, 10>}, {transform_indices = @transform_5, window_bounds = array<i64: 1, 1, 128>}]} {
    %c0 = arith.constant 0 : index
    %c0_0 = arith.constant 0 : index
    %c0_1 = arith.constant 0 : index
    %0 = vector.load %arg2[%c0, %c0_0, %c0_1] : memref<1x1x8xi32, #tpu.memory_space<vmem>>, vector<1x1x8xi32>
    %1 = vector.shape_cast %0 : vector<1x1x8xi32> to vector<1x8xi32>
    %c0_2 = arith.constant 0 : index
    %c0_3 = arith.constant 0 : index
    %c0_4 = arith.constant 0 : index
    %2 = vector.load %arg3[%c0_2, %c0_3, %c0_4] : memref<1x1x8xf32, #tpu.memory_space<vmem>>, vector<1x1x8xf32>
    %3 = vector.shape_cast %2 : vector<1x1x8xf32> to vector<1x8xf32>
    %cst = arith.constant 0.000000e+00 : f32
    %4 = vector.broadcast %cst : f32 to vector<10x8xf32>
    %c0_5 = arith.constant 0 : index
    %c0_6 = arith.constant 0 : index
    %c0_7 = arith.constant 0 : index
    %5 = vector.load %arg1[%c0_5, %c0_6, %c0_7] : memref<1x10x256xf32, #tpu.memory_space<vmem>>, vector<1x10x256xf32>
    %6 = vector.shape_cast %5 : vector<1x10x256xf32> to vector<10x256xf32>
    %7 = tpu.iota {dimensions = array<i32: 0>} : vector<256x8xi32>
    %c0_i32 = arith.constant 0 : i32
    %8 = vector.broadcast %c0_i32 : i32 to vector<256x8xi32>
    %9 = arith.addi %7, %8 : vector<256x8xi32>
    %10 = vector.broadcast %1 : vector<1x8xi32> to vector<256x8xi32>
    %11 = arith.cmpi eq, %9, %10 : vector<256x8xi32>
    %12 = arith.extui %11 : vector<256x8xi1> to vector<256x8xi32>
    %13 = arith.sitofp %12 : vector<256x8xi32> to vector<256x8xf32>
    %cst_8 = arith.constant dense<0.000000e+00> : vector<10x8xf32>
    %14 = tpu.matmul %6, %13, %cst_8 {dimension_numbers = #tpu.dot_dimension_numbers<[1], [0], [0], [1], [0, 0, 1, 1], [], []>, precision = #tpu.contract_precision<fp32>} : vector<10x256xf32>, vector<256x8xf32>, vector<10x8xf32> -> vector<10x8xf32>
    %15 = arith.addf %4, %14 : vector<10x8xf32>
    %c0_9 = arith.constant 0 : index
    %c0_10 = arith.constant 0 : index
    %16 = vector.load %arg5[%c0_9, %c0_10] : memref<32x10xf32, #tpu.memory_space<vmem>>, vector<32x10xf32>
    %cst_11 = arith.constant dense<0.000000e+00> : vector<32x8xf32>
    %17 = tpu.matmul %16, %15, %cst_11 {dimension_numbers = #tpu.dot_dimension_numbers<[1], [0], [0], [1], [0, 0, 1, 1], [], []>, precision = #tpu.contract_precision<fp32>} : vector<32x10xf32>, vector<10x8xf32>, vector<32x8xf32> -> vector<32x8xf32>
    %c0_12 = arith.constant 0 : index
    %c0_13 = arith.constant 0 : index
    %c0_14 = arith.constant 0 : index
    %18 = vector.load %arg4[%c0_12, %c0_13, %c0_14] : memref<1x10x8xf32, #tpu.memory_space<vmem>>, vector<1x10x8xf32>
    %19 = vector.shape_cast %18 : vector<1x10x8xf32> to vector<10x8xf32>
    %cst_15 = arith.constant dense<0.000000e+00> : vector<32x8xf32>
    %20 = tpu.matmul %16, %19, %cst_15 {dimension_numbers = #tpu.dot_dimension_numbers<[1], [0], [0], [1], [0, 0, 1, 1], [], []>, precision = #tpu.contract_precision<fp32>} : vector<32x10xf32>, vector<10x8xf32>, vector<32x8xf32> -> vector<32x8xf32>
    %21 = arith.subf %17, %20 : vector<32x8xf32>
    %22 = vector.broadcast %3 : vector<1x8xf32> to vector<32x8xf32>
    %23 = arith.mulf %21, %22 : vector<32x8xf32>
    %24 = math.absf %23 : vector<32x8xf32>
    %cst_16 = arith.constant 1.000000e+00 : f32
    %25 = vector.broadcast %cst_16 : f32 to vector<32x8xf32>
    %26 = arith.cmpf olt, %24, %25 : vector<32x8xf32>
    %cst_17 = arith.constant 5.000000e-01 : f32
    %27 = vector.broadcast %cst_17 : f32 to vector<32x8xf32>
    %28 = arith.mulf %27, %24 : vector<32x8xf32>
    %29 = arith.mulf %28, %24 : vector<32x8xf32>
    %cst_18 = arith.constant 5.000000e-01 : f32
    %30 = vector.broadcast %cst_18 : f32 to vector<32x8xf32>
    %31 = arith.subf %24, %30 : vector<32x8xf32>
    %32 = arith.select %26, %29, %31 : vector<32x8xi1>, vector<32x8xf32>
    %33 = vector.shape_cast %32 : vector<32x8xf32> to vector<1x32x8xf32>
    %cst_19 = arith.constant dense<0.000000e+00> : vector<1xf32>
    %34 = vector.multi_reduction <add>, %33, %cst_19 [1, 2] : vector<1x32x8xf32> to vector<1xf32>
    %35 = vector.shape_cast %34 : vector<1xf32> to vector<1x1x1xf32>
    %36 = vector.extract %35[0, 0, 0] : f32 from vector<1x1x1xf32>
    %37 = vector.shape_cast %3 : vector<1x8xf32> to vector<1x1x8xf32>
    %cst_20 = arith.constant dense<0.000000e+00> : vector<1xf32>
    %38 = vector.multi_reduction <add>, %37, %cst_20 [1, 2] : vector<1x1x8xf32> to vector<1xf32>
    %39 = vector.shape_cast %38 : vector<1xf32> to vector<1x1x1xf32>
    %40 = vector.extract %39[0, 0, 0] : f32 from vector<1x1x1xf32>
    %cst_21 = arith.constant 3.200000e+01 : f32
    %41 = arith.mulf %40, %cst_21 : f32
    %42 = tpu.iota {dimensions = array<i32: 2>} : vector<1x1x128xi32>
    %c0_i32_22 = arith.constant 0 : i32
    %43 = vector.broadcast %c0_i32_22 : i32 to vector<1x1x128xi32>
    %44 = arith.cmpi eq, %42, %43 : vector<1x1x128xi32>
    %c1_i32 = arith.constant 1 : i32
    %45 = vector.broadcast %c1_i32 : i32 to vector<1x1x128xi32>
    %46 = arith.cmpi eq, %42, %45 : vector<1x1x128xi32>
    %cst_23 = arith.constant 0.000000e+00 : f32
    %47 = vector.broadcast %41 : f32 to vector<1x1x128xf32>
    %48 = vector.broadcast %cst_23 : f32 to vector<1x1x128xf32>
    %49 = arith.select %46, %47, %48 : vector<1x1x128xi1>, vector<1x1x128xf32>
    %50 = vector.broadcast %36 : f32 to vector<1x1x128xf32>
    %51 = arith.select %44, %50, %49 : vector<1x1x128xi1>, vector<1x1x128xf32>
    %c0_24 = arith.constant 0 : index
    %c0_25 = arith.constant 0 : index
    %c0_26 = arith.constant 0 : index
    %52 = vector.load %arg6[%c0_24, %c0_25, %c0_26] : memref<1x1x128xf32, #tpu.memory_space<vmem>>, vector<1x1x128xf32>
    tpu.vector_store %arg6[%c0_24, %c0_25, %c0_26], %51 {strides = array<i32>} : memref<1x1x128xf32, #tpu.memory_space<vmem>>, vector<1x1x128xf32>,
    return
  }
  func.func @transform_0(%arg0: i32) -> (i32, i32, i32) {
    %c0_i32 = arith.constant 0 : i32
    %c0_i32_0 = arith.constant 0 : i32
    %c0_i32_1 = arith.constant 0 : i32
    return %arg0, %c0_i32, %c0_i32_0 : i32, i32, i32
  }
  func.func @transform_1(%arg0: i32) -> (i32, i32, i32) {
    %c0_i32 = arith.constant 0 : i32
    %c0_i32_0 = arith.constant 0 : i32
    %c0_i32_1 = arith.constant 0 : i32
    return %arg0, %c0_i32, %c0_i32_0 : i32, i32, i32
  }
  func.func @transform_2(%arg0: i32) -> (i32, i32, i32) {
    %c0_i32 = arith.constant 0 : i32
    %c0_i32_0 = arith.constant 0 : i32
    %c0_i32_1 = arith.constant 0 : i32
    return %arg0, %c0_i32, %c0_i32_0 : i32, i32, i32
  }
  func.func @transform_3(%arg0: i32) -> (i32, i32, i32) {
    %c0_i32 = arith.constant 0 : i32
    %c0_i32_0 = arith.constant 0 : i32
    %c0_i32_1 = arith.constant 0 : i32
    return %arg0, %c0_i32, %c0_i32_0 : i32, i32, i32
  }
  func.func @transform_4(%arg0: i32) -> (i32, i32) {
    %c0_i32 = arith.constant 0 : i32
    %c0_i32_0 = arith.constant 0 : i32
    %c0_i32_1 = arith.constant 0 : i32
    return %c0_i32, %c0_i32_0 : i32, i32
  }
  func.func @transform_5(%arg0: i32) -> (i32, i32, i32) {
    %c0_i32 = arith.constant 0 : i32
    %c0_i32_0 = arith.constant 0 : i32
    %c0_i32_1 = arith.constant 0 : i32
    return %arg0, %c0_i32, %c0_i32_0 : i32, i32, i32
  }
}

</mosaic_0001>

<llo_original>
// kernel: tpu_custom_call.1
$region0: #{tpu_custom_call.1}
  #allocation0 [shape = 'u32[]', space=smem, size = 0x4, offset = 0x4, fixed_abs, tag = 'smem constant byte address 0x4 - core index']
  #allocation1 [shape = 'u32[144,128]{1,0:T(1,128)}', space=vmem, size = 0x12000, scoped, tag = 'internal scratch']
  %s0 = inlined_call_operand.vmem [shape: f32[2,10,256], index: 0, kind: input, shape index: {}]
  %s1 = inlined_call_operand.vmem [shape: s32[2,1,8], index: 1, kind: input, shape index: {}]
  %s2 = inlined_call_operand.vmem [shape: f32[2,1,8], index: 2, kind: input, shape index: {}]
  %s3 = inlined_call_operand.vmem [shape: f32[2,10,8], index: 3, kind: input, shape index: {}]
  %s4 = inlined_call_operand.vmem [shape: f32[32,10], index: 4, kind: input, shape index: {}]
  %s5 = inlined_call_operand.hbm [shape: f32[2,1,128], index: 5, kind: output, shape index: {}]
  %s6 = sld [smem:[#allocation0]]
  $region53: #{tpu_custom_call.1} parent=0
    _
  %s8 = ssub.s32 1, %s6
  %s9 = scalar_select 0, %s8, %s6
  $region1: #{tpu_custom_call.1} parent=0
    #allocation2 [shape = 'u8[1024]{0}', space=vmem, size = 0x400, scoped, tag = 'output window, operand 0']
    #allocation3 [shape = 's32[2]{0}', space=sflag, size = 0x8, scoped, tag = 'scoped memory for tpu_custom_call.1']
    %10 = vsyncpa [#allocation3], 0
    %s11 = scalar_lea.sflag [#allocation3], 1
    %12 = vsyncpa %s11, 0
    loop: start=0, step=1, limit=4
    $region2: #{tpu_custom_call.1} parent=1 // loop_pre_header
      _
    $region3: #{tpu_custom_call.1} parent=1 // loop_header
      %s14 = sphi 0, %s18
      %p15 = scmp.ge.s32.totalorder %s14, 4
      %s24 = sphi 0, %s26
      %s27 = sphi 0, %s24
      %s28 = sphi 0, %s27
      %s44 = sphi 0, %s28
      %s50 = sphi 0, %s52
      %s53 = sphi 0, %s50
      %s54 = sphi 0, %s53
      %s70 = sphi 0, %s54
      %s76 = sphi 0, %s78
      %s79 = sphi 0, %s76
      %s80 = sphi 0, %s79
      %s96 = sphi 0, %s80
      %s102 = sphi 0, %s104
      %s105 = sphi 0, %s102
      %s106 = sphi 0, %s105
      %s122 = sphi 0, %s106
      %s126 = sphi 0, %s126
      %s128 = sphi 0, %s126
      %s129 = sphi 0, %s128
      %s143 = sphi 0, %s129
      %s149 = sphi 0, %s151
      %s152 = sphi 0, %s149
      %s153 = sphi 0, %s152
      %s169 = sphi 0, %s153
    $region4: #{tpu_custom_call.1} parent=1 // loop_header_branch
      %17 = sbr.rel (%p15) target = $region8
    $region5: #{tpu_custom_call.1} parent=1 // loop_body
      %s19 = ssub.s32 %s14, 1
      %s20 = ssub.s32 %s14, 2
      %s21 = sadd.s32 %s14, 1
      %s22 = ssub.s32 %s14, %s21
      %p23 = scmp.eq.s32.totalorder %s22, 0
      %s25 = sadd.s32 %s24, 1
      %s26 = scalar_select %p23, %s24, %s25
      %p29 = pneg %p23
      %p30 = scmp.eq.s32.totalorder %s14, 1
      %p31 = por %p29, %p30
      %p32 = scmp.ne.s32.totalorder %s24, %s27
      %p33 = scmp.eq.s32.totalorder %s14, 0
      %p34 = por %p32, %p33
      %p35 = scmp.ne.s32.totalorder %s24, %s27
      %p36 = scmp.eq.s32.totalorder %s19, 1
      %p37 = por %p35, %p36
      %p38 = scmp.ne.s32.totalorder %s27, %s28
      %p39 = scmp.eq.s32.totalorder %s19, 0
      %p40 = por %p38, %p39
      %p41 = scmp.ne.s32.totalorder %s27, %s28
      %p42 = scmp.eq.s32.totalorder %s20, 1
      %p43 = por %p41, %p42
      %p45 = scmp.ne.s32.totalorder %s28, %s44
      %p46 = scmp.eq.s32.totalorder %s20, 0
      %p47 = por %p45, %p46
      %s48 = ssub.s32 %s14, %s21
      %p49 = scmp.eq.s32.totalorder %s48, 0
      %s51 = sadd.s32 %s50, 1
      %s52 = scalar_select %p49, %s50, %s51
      %p55 = pneg %p49
      %p56 = scmp.eq.s32.totalorder %s14, 1
      %p57 = por %p55, %p56
      %p58 = scmp.ne.s32.totalorder %s50, %s53
      %p59 = scmp.eq.s32.totalorder %s14, 0
      %p60 = por %p58, %p59
      %p61 = scmp.ne.s32.totalorder %s50, %s53
      %p62 = scmp.eq.s32.totalorder %s19, 1
      %p63 = por %p61, %p62
      %p64 = scmp.ne.s32.totalorder %s53, %s54
      %p65 = scmp.eq.s32.totalorder %s19, 0
      %p66 = por %p64, %p65
      %p67 = scmp.ne.s32.totalorder %s53, %s54
      %p68 = scmp.eq.s32.totalorder %s20, 1
      %p69 = por %p67, %p68
      %p71 = scmp.ne.s32.totalorder %s54, %s70
      %p72 = scmp.eq.s32.totalorder %s20, 0
      %p73 = por %p71, %p72
      %s74 = ssub.s32 %s14, %s21
      %p75 = scmp.eq.s32.totalorder %s74, 0
      %s77 = sadd.s32 %s76, 1
      %s78 = scalar_select %p75, %s76, %s77
      %p81 = pneg %p75
      %p82 = scmp.eq.s32.totalorder %s14, 1
      %p83 = por %p81, %p82
      %p84 = scmp.ne.s32.totalorder %s76, %s79
      %p85 = scmp.eq.s32.totalorder %s14, 0
      %p86 = por %p84, %p85
      %p87 = scmp.ne.s32.totalorder %s76, %s79
      %p88 = scmp.eq.s32.totalorder %s19, 1
      %p89 = por %p87, %p88
      %p90 = scmp.ne.s32.totalorder %s79, %s80
      %p91 = scmp.eq.s32.totalorder %s19, 0
      %p92 = por %p90, %p91
      %p93 = scmp.ne.s32.totalorder %s79, %s80
      %p94 = scmp.eq.s32.totalorder %s20, 1
      %p95 = por %p93, %p94
      %p97 = scmp.ne.s32.totalorder %s80, %s96
      %p98 = scmp.eq.s32.totalorder %s20, 0
      %p99 = por %p97, %p98
      %s100 = ssub.s32 %s14, %s21
      %p101 = scmp.eq.s32.totalorder %s100, 0
      %s103 = sadd.s32 %s102, 1
      %s104 = scalar_select %p101, %s102, %s103
      %p107 = pneg %p101
      %p108 = scmp.eq.s32.totalorder %s14, 1
      %p109 = por %p107, %p108
      %p110 = scmp.ne.s32.totalorder %s102, %s105
      %p111 = scmp.eq.s32.totalorder %s14, 0
      %p112 = por %p110, %p111
      %p113 = scmp.ne.s32.totalorder %s102, %s105
      %p114 = scmp.eq.s32.totalorder %s19, 1
      %p115 = por %p113, %p114
      %p116 = scmp.ne.s32.totalorder %s105, %s106
      %p117 = scmp.eq.s32.totalorder %s19, 0
      %p118 = por %p116, %p117
      %p119 = scmp.ne.s32.totalorder %s105, %s106
      %p120 = scmp.eq.s32.totalorder %s20, 1
      %p121 = por %p119, %p120
      %p123 = scmp.ne.s32.totalorder %s106, %s122
      %p124 = scmp.eq.s32.totalorder %s20, 0
      %p125 = por %p123, %p124
      %s127 = sadd.s32 %s126, 1
      %p130 = scmp.eq.s32.totalorder %s14, 1
      %p131 = scmp.ne.s32.totalorder %s126, %s128
      %p132 = scmp.eq.s32.totalorder %s14, 0
      %p133 = por %p131, %p132
      %p134 = scmp.ne.s32.totalorder %s126, %s128
      %p135 = scmp.eq.s32.totalorder %s19, 1
      %p136 = por %p134, %p135
      %p137 = scmp.ne.s32.totalorder %s128, %s129
      %p138 = scmp.eq.s32.totalorder %s19, 0
      %p139 = por %p137, %p138
      %p140 = scmp.ne.s32.totalorder %s128, %s129
      %p141 = scmp.eq.s32.totalorder %s20, 1
      %p142 = por %p140, %p141
      %p144 = scmp.ne.s32.totalorder %s129, %s143
      %p145 = scmp.eq.s32.totalorder %s20, 0
      %p146 = por %p144, %p145
      %s147 = ssub.s32 %s14, %s21
      %p148 = scmp.eq.s32.totalorder %s147, 0
      %s150 = sadd.s32 %s149, 1
      %s151 = scalar_select %p148, %s149, %s150
      %p154 = pneg %p148
      %p155 = scmp.eq.s32.totalorder %s14, 1
      %p156 = por %p154, %p155
      %p157 = scmp.ne.s32.totalorder %s149, %s152
      %p158 = scmp.eq.s32.totalorder %s14, 0
      %p159 = por %p157, %p158
      %p160 = scmp.ne.s32.totalorder %s149, %s152
      %p161 = scmp.eq.s32.totalorder %s19, 1
      %p162 = por %p160, %p161
      %p163 = scmp.ne.s32.totalorder %s152, %s153
      %p164 = scmp.eq.s32.totalorder %s19, 0
      %p165 = por %p163, %p164
      %p166 = scmp.ne.s32.totalorder %s152, %s153
      %p167 = scmp.eq.s32.totalorder %s20, 1
      %p168 = por %p166, %p167
      %p170 = scmp.ne.s32.totalorder %s153, %s169
      %p171 = scmp.eq.s32.totalorder %s20, 0
      %p172 = por %p170, %p171
      %p173 = scmp.le.s32.totalorder 1, %s14
      %p174 = scmp.lt.s32.totalorder %s14, 3
      %p175 = pnand %p173, %p174
      %p176 = pneg %p175
      // Predicated region
      $region9: #{tpu_custom_call.1} parent=5 // pred_check
        _
      $region10: #{tpu_custom_call.1} parent=5 // pred_check_branch
        %178 = sbr.rel (%p175) target = $region12
      $region11: #{tpu_custom_call.1} parent=5 // pred_region
        %s179 = ssub.s32 %s14, 1
        // Predicated region
        $region13: #{tpu_custom_call.1} parent=11 // pred_check
          %p180 = pneg %p139
        $region14: #{tpu_custom_call.1} parent=11 // pred_check_branch
          %182 = sbr.rel (%p180) target = $region16
        $region15: #{tpu_custom_call.1} parent=11 // pred_region
          _
        $region16: #{tpu_custom_call.1} parent=11 // pred_fallthru
          _
      $region12: #{tpu_custom_call.1} parent=5 // pred_fallthru
        _
      %p183 = scmp.lt.s32.totalorder %s14, 2
      // Predicated region
      $region17: #{tpu_custom_call.1} parent=5 // pred_check
        %p184 = pneg %p183
      $region18: #{tpu_custom_call.1} parent=5 // pred_check_branch
        %186 = sbr.rel (%p184) target = $region20
      $region19: #{tpu_custom_call.1} parent=5 // pred_region
        // Predicated region
        $region21: #{tpu_custom_call.1} parent=19 // pred_check
          %p187 = pneg %p34
        $region22: #{tpu_custom_call.1} parent=19 // pred_check_branch
          %189 = sbr.rel (%p187) target = $region24
        $region23: #{tpu_custom_call.1} parent=19 // pred_region
          %p190 = scmp.lt.s32.totalorder %s14, 1
          %s191 = scalar_select %p190, %s14, 1
          %s192 = smul.addr %s191, 4
          %s193 = smul.addr %s192, 8
          %s194 = scalar_lea.vmem %s0, %s193
        $region24: #{tpu_custom_call.1} parent=19 // pred_fallthru
          _
        // Predicated region
        $region25: #{tpu_custom_call.1} parent=19 // pred_check
          %p195 = pneg %p60
        $region26: #{tpu_custom_call.1} parent=19 // pred_check_branch
          %197 = sbr.rel (%p195) target = $region28
        $region27: #{tpu_custom_call.1} parent=19 // pred_region
          %p198 = scmp.lt.s32.totalorder %s14, 1
          %s199 = scalar_select %p198, %s14, 1
          %s200 = scalar_lea.vmem %s1, %s199
        $region28: #{tpu_custom_call.1} parent=19 // pred_fallthru
          _
        // Predicated region
        $region29: #{tpu_custom_call.1} parent=19 // pred_check
          %p201 = pneg %p86
        $region30: #{tpu_custom_call.1} parent=19 // pred_check_branch
          %203 = sbr.rel (%p201) target = $region32
        $region31: #{tpu_custom_call.1} parent=19 // pred_region
          %p204 = scmp.lt.s32.totalorder %s14, 1
          %s205 = scalar_select %p204, %s14, 1
          %s206 = scalar_lea.vmem %s2, %s205
        $region32: #{tpu_custom_call.1} parent=19 // pred_fallthru
          _
        // Predicated region
        $region33: #{tpu_custom_call.1} parent=19 // pred_check
          %p207 = pneg %p112
        $region34: #{tpu_custom_call.1} parent=19 // pred_check_branch
          %209 = sbr.rel (%p207) target = $region36
        $region35: #{tpu_custom_call.1} parent=19 // pred_region
          %p210 = scmp.lt.s32.totalorder %s14, 1
          %s211 = scalar_select %p210, %s14, 1
          %s212 = smul.addr %s211, 2
          %s213 = smul.addr %s212, 8
          %s214 = scalar_lea.vmem %s3, %s213
        $region36: #{tpu_custom_call.1} parent=19 // pred_fallthru
          _
      $region20: #{tpu_custom_call.1} parent=5 // pred_fallthru
        _
      %p215 = scmp.le.s32.totalorder 1, %s14
      %p216 = scmp.lt.s32.totalorder %s14, 3
      %p217 = pnand %p215, %p216
      %p218 = pneg %p217
      // Predicated region
      $region37: #{tpu_custom_call.1} parent=5 // pred_check
        _
      $region38: #{tpu_custom_call.1} parent=5 // pred_check_branch
        %220 = sbr.rel (%p217) target = $region40
      $region39: #{tpu_custom_call.1} parent=5 // pred_region
        %s221 = ssub.s32 %s14, 1
        %p222 = scmp.lt.s32.totalorder %s19, 1
        %s223 = scalar_select %p222, %s19, 1
        %s224 = smul.addr %s223, 4
        %s225 = smul.addr %s224, 8
        %s226 = scalar_lea.vmem %s0, %s225
        %p227 = pneg %p40
        %p228 = pneg %p37
        %p229 = scmp.lt.s32.totalorder %s19, 1
        %s230 = scalar_select %p229, %s19, 1
        %s231 = scalar_lea.vmem %s1, %s230
        %p232 = pneg %p66
        %p233 = pneg %p63
        %p234 = scmp.lt.s32.totalorder %s19, 1
        %s235 = scalar_select %p234, %s19, 1
        %s236 = scalar_lea.vmem %s2, %s235
        %p237 = pneg %p92
        %p238 = pneg %p89
        %p239 = scmp.lt.s32.totalorder %s19, 1
        %s240 = scalar_select %p239, %s19, 1
        %s241 = smul.addr %s240, 2
        %s242 = smul.addr %s241, 8
        %s243 = scalar_lea.vmem %s3, %s242
        %p244 = pneg %p118
        %p245 = pneg %p115
        %p246 = pneg %p139
        %p247 = pneg %p136
        %p248 = pneg %p165
        %p249 = pneg %p162
        %s250 = sand.u32 %s152, 1
        %s251 = scalar_lea.sflag [#allocation3], %s250
        %s252 = sand.u32 %s152, 1
        %s253 = scalar_lea.vmem [#allocation2], %s252
        %p254 = scmp.lt.s32.totalorder %s19, 1
        %s255 = scalar_select %p254, %s19, 1
        %s256 = smul.addr %s255, 4
        %s257 = smul.addr %s256, 8
        %s258 = scalar_lea.vmem %s0, %s257
        %p259 = scmp.lt.s32.totalorder %s19, 1
        %s260 = scalar_select %p259, %s19, 1
        %s261 = scalar_lea.vmem %s1, %s260
        %p262 = scmp.lt.s32.totalorder %s19, 1
        %s263 = scalar_select %p262, %s19, 1
        %s264 = scalar_lea.vmem %s2, %s263
        %p265 = scmp.lt.s32.totalorder %s19, 1
        %s266 = scalar_select %p265, %s19, 1
        %s267 = smul.addr %s266, 2
        %s268 = smul.addr %s267, 8
        %s269 = scalar_lea.vmem %s3, %s268
        %v270 = vld [vmem:[%s261] sm:$0x1]
        %v271 = vld [vmem:[%s264] sm:$0x1]
        %v272 = vld [vmem:[%s258] sm:$0xff]
        %v273 = vld [vmem:[%s258 + $0x8] sm:$0xff]
        %v274 = vld [vmem:[%s258 + $0x10] sm:$0x3]
        %v275 = vld [vmem:[%s258 + $0x18] sm:$0x3]
        %v276 = vlaneseq
        %v277 = vshrl.u32 %v276, 7
        %v278 = vadd.s32 %v277, 8
        %v279 = vadd.s32 %v277, 16
        %v280 = vadd.s32 %v277, 24
        %v281 = vadd.s32 %v277, 32
        %v282 = vadd.s32 %v277, 40
        %v283 = vadd.s32 %v277, 48
        %v284 = vadd.s32 %v277, 56
        %v285 = vadd.s32 %v277, 64
        %v286 = vadd.s32 %v277, 72
        %v287 = vadd.s32 %v277, 80
        %v288 = vadd.s32 %v277, 88
        %v289 = vadd.s32 %v277, 96
        %v290 = vadd.s32 %v277, 104
        %v291 = vadd.s32 %v277, 112
        %v292 = vadd.s32 %v277, 120
        %v293 = vadd.s32 %v277, 128
        %v294 = vadd.s32 %v277, 136
        %v295 = vadd.s32 %v277, 144
        %v296 = vadd.s32 %v277, 152
        %v297 = vadd.s32 %v277, 160
        %v298 = vadd.s32 %v277, 168
        %v299 = vadd.s32 %v277, 176
        %v300 = vadd.s32 %v277, 184
        %v301 = vadd.s32 %v277, 192
        %v302 = vadd.s32 %v277, 200
        %v303 = vadd.s32 %v277, 208
        %v304 = vadd.s32 %v277, 216
        %v305 = vadd.s32 %v277, 224
        %v306 = vadd.s32 %v277, 232
        %v307 = vadd.s32 %v277, 240
        %v308 = vadd.s32 %v277, 248
        %v309 = vlaneseq
        %v310 = vshrl.u32 %v309, 7
        %v311 = vsub.s32 0, %v310
        %v312 = vrot.slane %v270, %v311
        %vm313 = vcmp.eq.s32.totalorder %v277, %v312
        %vm314 = vcmp.eq.s32.totalorder %v278, %v312
        %vm315 = vcmp.eq.s32.totalorder %v279, %v312
        %vm316 = vcmp.eq.s32.totalorder %v280, %v312
        %vm317 = vcmp.eq.s32.totalorder %v281, %v312
        %vm318 = vcmp.eq.s32.totalorder %v282, %v312
        %vm319 = vcmp.eq.s32.totalorder %v283, %v312
        %vm320 = vcmp.eq.s32.totalorder %v284, %v312
        %vm321 = vcmp.eq.s32.totalorder %v285, %v312
        %vm322 = vcmp.eq.s32.totalorder %v286, %v312
        %vm323 = vcmp.eq.s32.totalorder %v287, %v312
        %vm324 = vcmp.eq.s32.totalorder %v288, %v312
        %vm325 = vcmp.eq.s32.totalorder %v289, %v312
        %vm326 = vcmp.eq.s32.totalorder %v290, %v312
        %vm327 = vcmp.eq.s32.totalorder %v291, %v312
        %vm328 = vcmp.eq.s32.totalorder %v292, %v312
        %vm329 = vcmp.eq.s32.totalorder %v293, %v312
        %vm330 = vcmp.eq.s32.totalorder %v294, %v312
        %vm331 = vcmp.eq.s32.totalorder %v295, %v312
        %vm332 = vcmp.eq.s32.totalorder %v296, %v312
        %vm333 = vcmp.eq.s32.totalorder %v297, %v312
        %vm334 = vcmp.eq.s32.totalorder %v298, %v312
        %vm335 = vcmp.eq.s32.totalorder %v299, %v312
        %vm336 = vcmp.eq.s32.totalorder %v300, %v312
        %vm337 = vcmp.eq.s32.totalorder %v301, %v312
        %vm338 = vcmp.eq.s32.totalorder %v302, %v312
        %vm339 = vcmp.eq.s32.totalorder %v303, %v312
        %vm340 = vcmp.eq.s32.totalorder %v304, %v312
        %vm341 = vcmp.eq.s32.totalorder %v305, %v312
        %vm342 = vcmp.eq.s32.totalorder %v306, %v312
        %vm343 = vcmp.eq.s32.totalorder %v307, %v312
        %vm344 = vcmp.eq.s32.totalorder %v308, %v312
        %v345 = vsel %vm313, 1, 0
        %v346 = vsel %vm314, 1, 0
        %v347 = vsel %vm315, 1, 0
        %v348 = vsel %vm316, 1, 0
        %v349 = vsel %vm317, 1, 0
        %v350 = vsel %vm318, 1, 0
        %v351 = vsel %vm319, 1, 0
        %v352 = vsel %vm320, 1, 0
        %v353 = vsel %vm321, 1, 0
        %v354 = vsel %vm322, 1, 0
        %v355 = vsel %vm323, 1, 0
        %v356 = vsel %vm324, 1, 0
        %v357 = vsel %vm325, 1, 0
        %v358 = vsel %vm326, 1, 0
        %v359 = vsel %vm327, 1, 0
        %v360 = vsel %vm328, 1, 0
        %v361 = vsel %vm329, 1, 0
        %v362 = vsel %vm330, 1, 0
        %v363 = vsel %vm331, 1, 0
        %v364 = vsel %vm332, 1, 0
        %v365 = vsel %vm333, 1, 0
        %v366 = vsel %vm334, 1, 0
        %v367 = vsel %vm335, 1, 0
        %v368 = vsel %vm336, 1, 0
        %v369 = vsel %vm337, 1, 0
        %v370 = vsel %vm338, 1, 0
        %v371 = vsel %vm339, 1, 0
        %v372 = vsel %vm340, 1, 0
        %v373 = vsel %vm341, 1, 0
        %v374 = vsel %vm342, 1, 0
        %v375 = vsel %vm343, 1, 0
        %v376 = vsel %vm344, 1, 0
        %v377 = vcvt.s32.f32 %v345
        %v378 = vcvt.s32.f32 %v346
        %v379 = vcvt.s32.f32 %v347
        %v380 = vcvt.s32.f32 %v348
        %v381 = vcvt.s32.f32 %v349
        %v382 = vcvt.s32.f32 %v350
        %v383 = vcvt.s32.f32 %v351
        %v384 = vcvt.s32.f32 %v352
        %v385 = vcvt.s32.f32 %v353
        %v386 = vcvt.s32.f32 %v354
        %v387 = vcvt.s32.f32 %v355
        %v388 = vcvt.s32.f32 %v356
        %v389 = vcvt.s32.f32 %v357
        %v390 = vcvt.s32.f32 %v358
        %v391 = vcvt.s32.f32 %v359
        %v392 = vcvt.s32.f32 %v360
        %v393 = vcvt.s32.f32 %v361
        %v394 = vcvt.s32.f32 %v362
        %v395 = vcvt.s32.f32 %v363
        %v396 = vcvt.s32.f32 %v364
        %v397 = vcvt.s32.f32 %v365
        %v398 = vcvt.s32.f32 %v366
        %v399 = vcvt.s32.f32 %v367
        %v400 = vcvt.s32.f32 %v368
        %v401 = vcvt.s32.f32 %v369
        %v402 = vcvt.s32.f32 %v370
        %v403 = vcvt.s32.f32 %v371
        %v404 = vcvt.s32.f32 %v372
        %v405 = vcvt.s32.f32 %v373
        %v406 = vcvt.s32.f32 %v374
        %v407 = vcvt.s32.f32 %v375
        %v408 = vcvt.s32.f32 %v376
        %409 = vmatprep.subr.mxu0 0.0
        %v410 = vand.u32 %v392, 4294901760
        %411 = vmatpush1.msra.mxu0 %v410
        %412 = vmatprep.subr.mxu0 0.0
        %v413 = vand.u32 %v391, 4294901760
        %414 = vmatpush1.msra.mxu0 %v413
        %415 = vmatprep.subr.mxu0 0.0
        %v416 = vand.u32 %v390, 4294901760
        %417 = vmatpush1.msra.mxu0 %v416
        %418 = vmatprep.subr.mxu0 0.0
        %v419 = vand.u32 %v389, 4294901760
        %420 = vmatpush1.msra.mxu0 %v419
        %421 = vmatprep.subr.mxu0 0.0
        %v422 = vand.u32 %v388, 4294901760
        %423 = vmatpush1.msra.mxu0 %v422
        %424 = vmatprep.subr.mxu0 0.0
        %v425 = vand.u32 %v387, 4294901760
        %426 = vmatpush1.msra.mxu0 %v425
        %427 = vmatprep.subr.mxu0 0.0
        %v428 = vand.u32 %v386, 4294901760
        %429 = vmatpush1.msra.mxu0 %v428
        %430 = vmatprep.subr.mxu0 0.0
        %v431 = vand.u32 %v385, 4294901760
        %432 = vmatpush1.msra.mxu0 %v431
        %433 = vmatprep.subr.mxu0 0.0
        %v434 = vand.u32 %v384, 4294901760
        %435 = vmatpush1.msra.mxu0 %v434
        %436 = vmatprep.subr.mxu0 0.0
        %v437 = vand.u32 %v383, 4294901760
        %438 = vmatpush1.msra.mxu0 %v437
        %439 = vmatprep.subr.mxu0 0.0
        %v440 = vand.u32 %v382, 4294901760
        %441 = vmatpush1.msra.mxu0 %v440
        %442 = vmatprep.subr.mxu0 0.0
        %v443 = vand.u32 %v381, 4294901760
        %444 = vmatpush1.msra.mxu0 %v443
        %445 = vmatprep.subr.mxu0 0.0
        %v446 = vand.u32 %v380, 4294901760
        %447 = vmatpush1.msra.mxu0 %v446
        %448 = vmatprep.subr.mxu0 0.0
        %v449 = vand.u32 %v379, 4294901760
        %450 = vmatpush1.msra.mxu0 %v449
        %451 = vmatprep.subr.mxu0 0.0
        %v452 = vand.u32 %v378, 4294901760
        %453 = vmatpush1.msra.mxu0 %v452
        %454 = vmatprep.subr.mxu0 0.0
        %v455 = vand.u32 %v377, 4294901760
        %456 = vmatpush1.msra.mxu0 %v455
        %457 = vmatprep.subr.mxu0 0.0
        %v458 = vand.u32 %v408, 4294901760
        %459 = vmatpush2.msra.mxu0 %v458
        %460 = vmatprep.subr.mxu0 0.0
        %v461 = vand.u32 %v407, 4294901760
        %462 = vmatpush2.msra.mxu0 %v461
        %463 = vmatprep.subr.mxu0 0.0
        %v464 = vand.u32 %v406, 4294901760
        %465 = vmatpush2.msra.mxu0 %v464
        %466 = vmatprep.subr.mxu0 0.0
        %v467 = vand.u32 %v405, 4294901760
        %468 = vmatpush2.msra.mxu0 %v467
        %469 = vmatprep.subr.mxu0 0.0
        %v470 = vand.u32 %v404, 4294901760
        %471 = vmatpush2.msra.mxu0 %v470
        %472 = vmatprep.subr.mxu0 0.0
        %v473 = vand.u32 %v403, 4294901760
        %474 = vmatpush2.msra.mxu0 %v473
        %475 = vmatprep.subr.mxu0 0.0
        %v476 = vand.u32 %v402, 4294901760
        %477 = vmatpush2.msra.mxu0 %v476
        %478 = vmatprep.subr.mxu0 0.0
        %v479 = vand.u32 %v401, 4294901760
        %480 = vmatpush2.msra.mxu0 %v479
        %481 = vmatprep.subr.mxu0 0.0
        %v482 = vand.u32 %v400, 4294901760
        %483 = vmatpush2.msra.mxu0 %v482
        %484 = vmatprep.subr.mxu0 0.0
        %v485 = vand.u32 %v399, 4294901760
        %486 = vmatpush2.msra.mxu0 %v485
        %487 = vmatprep.subr.mxu0 0.0
        %v488 = vand.u32 %v398, 4294901760
        %489 = vmatpush2.msra.mxu0 %v488
        %490 = vmatprep.subr.mxu0 0.0
        %v491 = vand.u32 %v397, 4294901760
        %492 = vmatpush2.msra.mxu0 %v491
        %493 = vmatprep.subr.mxu0 0.0
        %v494 = vand.u32 %v396, 4294901760
        %495 = vmatpush2.msra.mxu0 %v494
        %496 = vmatprep.subr.mxu0 0.0
        %v497 = vand.u32 %v395, 4294901760
        %498 = vmatpush2.msra.mxu0 %v497
        %499 = vmatprep.subr.mxu0 0.0
        %v500 = vand.u32 %v394, 4294901760
        %501 = vmatpush2.msra.mxu0 %v500
        %502 = vmatprep.subr.mxu0 0.0
        %v503 = vand.u32 %v393, 4294901760
        %504 = vmatpush2.msra.mxu0 %v503
        %v505 = vand.u32 %v273, 4294901760
        %v506 = vsub.f32 %v273, %v505
        %v507 = vand.u32 %v506, 4294901760
        %v508 = vsub.f32 %v506, %v507
        %v509 = vand.u32 %v508, 4294901760
        %510 = vmatprep.mubr.f32.mxu0 %v509
        %v511 = vand.u32 %v272, 4294901760
        %v512 = vsub.f32 %v272, %v511
        %v513 = vand.u32 %v512, 4294901760
        %v514 = vsub.f32 %v512, %v513
        %v515 = vand.u32 %v514, 4294901760
        %516 = vmatmul.mubr.f32.gmra.mxu0 %v515
        %v517 = vpop.f32.mrf.mxu0
        %v518 = vadd.f32 0.0, %v517
        %v519 = vpop.f32.mrf.mxu0
        %v520 = vand.u32 %v275, 4294901760
        %v521 = vsub.f32 %v275, %v520
        %v522 = vand.u32 %v521, 4294901760
        %v523 = vsub.f32 %v521, %v522
        %v524 = vand.u32 %v523, 4294901760
        %525 = vmatprep.mubr.f32.mxu0 %v524
        %v526 = vand.u32 %v274, 4294901760
        %v527 = vsub.f32 %v274, %v526
        %v528 = vand.u32 %v527, 4294901760
        %v529 = vsub.f32 %v527, %v528
        %v530 = vand.u32 %v529, 4294901760
        %531 = vmatmul.mubr.f32.gmra.mxu0 %v530
        %v532 = vpop.f32.mrf.mxu0
        %v533 = vadd.f32 0.0, %v532
        %v534 = vpop.f32.mrf.mxu0
        %535 = vdwg.mxu0
        %536 = vmatprep.subr.mxu0 0.0
        %v537 = vand.u32 %v392, 4294901760
        %v538 = vsub.f32 %v392, %v537
        %v539 = vand.u32 %v538, 4294901760
        %v540 = vsub.f32 %v538, %v539
        %v541 = vand.u32 %v540, 4294901760
        %542 = vmatpush1.msra.mxu0 %v541
        %543 = vmatprep.subr.mxu0 0.0
        %v544 = vand.u32 %v391, 4294901760
        %v545 = vsub.f32 %v391, %v544
        %v546 = vand.u32 %v545, 4294901760
        %v547 = vsub.f32 %v545, %v546
        %v548 = vand.u32 %v547, 4294901760
        %549 = vmatpush1.msra.mxu0 %v548
        %550 = vmatprep.subr.mxu0 0.0
        %v551 = vand.u32 %v390, 4294901760
        %v552 = vsub.f32 %v390, %v551
        %v553 = vand.u32 %v552, 4294901760
        %v554 = vsub.f32 %v552, %v553
        %v555 = vand.u32 %v554, 4294901760
        %556 = vmatpush1.msra.mxu0 %v555
        %557 = vmatprep.subr.mxu0 0.0
        %v558 = vand.u32 %v389, 4294901760
        %v559 = vsub.f32 %v389, %v558
        %v560 = vand.u32 %v559, 4294901760
        %v561 = vsub.f32 %v559, %v560
        %v562 = vand.u32 %v561, 4294901760
        %563 = vmatpush1.msra.mxu0 %v562
        %564 = vmatprep.subr.mxu0 0.0
        %v565 = vand.u32 %v388, 4294901760
        %v566 = vsub.f32 %v388, %v565
        %v567 = vand.u32 %v566, 4294901760
        %v568 = vsub.f32 %v566, %v567
        %v569 = vand.u32 %v568, 4294901760
        %570 = vmatpush1.msra.mxu0 %v569
        %571 = vmatprep.subr.mxu0 0.0
        %v572 = vand.u32 %v387, 4294901760
        %v573 = vsub.f32 %v387, %v572
        %v574 = vand.u32 %v573, 4294901760
        %v575 = vsub.f32 %v573, %v574
        %v576 = vand.u32 %v575, 4294901760
        %577 = vmatpush1.msra.mxu0 %v576
        %578 = vmatprep.subr.mxu0 0.0
        %v579 = vand.u32 %v386, 4294901760
        %v580 = vsub.f32 %v386, %v579
        %v581 = vand.u32 %v580, 4294901760
        %v582 = vsub.f32 %v580, %v581
        %v583 = vand.u32 %v582, 4294901760
        %584 = vmatpush1.msra.mxu0 %v583
        %585 = vmatprep.subr.mxu0 0.0
        %v586 = vand.u32 %v385, 4294901760
        %v587 = vsub.f32 %v385, %v586
        %v588 = vand.u32 %v587, 4294901760
        %v589 = vsub.f32 %v587, %v588
        %v590 = vand.u32 %v589, 4294901760
        %591 = vmatpush1.msra.mxu0 %v590
        %592 = vmatprep.subr.mxu0 0.0
        %v593 = vand.u32 %v384, 4294901760
        %v594 = vsub.f32 %v384, %v593
        %v595 = vand.u32 %v594, 4294901760
        %v596 = vsub.f32 %v594, %v595
        %v597 = vand.u32 %v596, 4294901760
        %598 = vmatpush1.msra.mxu0 %v597
        %599 = vmatprep.subr.mxu0 0.0
        %v600 = vand.u32 %v383, 4294901760
        %v601 = vsub.f32 %v383, %v600
        %v602 = vand.u32 %v601, 4294901760
        %v603 = vsub.f32 %v601, %v602
        %v604 = vand.u32 %v603, 4294901760
        %605 = vmatpush1.msra.mxu0 %v604
        %606 = vmatprep.subr.mxu0 0.0
        %v607 = vand.u32 %v382, 4294901760
        %v608 = vsub.f32 %v382, %v607
        %v609 = vand.u32 %v608, 4294901760
        %v610 = vsub.f32 %v608, %v609
        %v611 = vand.u32 %v610, 4294901760
        %612 = vmatpush1.msra.mxu0 %v611
        %613 = vmatprep.subr.mxu0 0.0
        %v614 = vand.u32 %v381, 4294901760
        %v615 = vsub.f32 %v381, %v614
        %v616 = vand.u32 %v615, 4294901760
        %v617 = vsub.f32 %v615, %v616
        %v618 = vand.u32 %v617, 4294901760
        %619 = vmatpush1.msra.mxu0 %v618
        %620 = vmatprep.subr.mxu0 0.0
        %v621 = vand.u32 %v380, 4294901760
        %v622 = vsub.f32 %v380, %v621
        %v623 = vand.u32 %v622, 4294901760
        %v624 = vsub.f32 %v622, %v623
        %v625 = vand.u32 %v624, 4294901760
        %626 = vmatpush1.msra.mxu0 %v625
        %627 = vmatprep.subr.mxu0 0.0
        %v628 = vand.u32 %v379, 4294901760
        %v629 = vsub.f32 %v379, %v628
        %v630 = vand.u32 %v629, 4294901760
        %v631 = vsub.f32 %v629, %v630
        %v632 = vand.u32 %v631, 4294901760
        %633 = vmatpush1.msra.mxu0 %v632
        %634 = vmatprep.subr.mxu0 0.0
        %v635 = vand.u32 %v378, 4294901760
        %v636 = vsub.f32 %v378, %v635
        %v637 = vand.u32 %v636, 4294901760
        %v638 = vsub.f32 %v636, %v637
        %v639 = vand.u32 %v638, 4294901760
        %640 = vmatpush1.msra.mxu0 %v639
        %641 = vmatprep.subr.mxu0 0.0
        %v642 = vand.u32 %v377, 4294901760
        %v643 = vsub.f32 %v377, %v642
        %v644 = vand.u32 %v643, 4294901760
        %v645 = vsub.f32 %v643, %v644
        %v646 = vand.u32 %v645, 4294901760
        %647 = vmatpush1.msra.mxu0 %v646
        %648 = vmatprep.subr.mxu0 0.0
        %v649 = vand.u32 %v408, 4294901760
        %v650 = vsub.f32 %v408, %v649
        %v651 = vand.u32 %v650, 4294901760
        %v652 = vsub.f32 %v650, %v651
        %v653 = vand.u32 %v652, 4294901760
        %654 = vmatpush2.msra.mxu0 %v653
        %655 = vmatprep.subr.mxu0 0.0
        %v656 = vand.u32 %v407, 4294901760
        %v657 = vsub.f32 %v407, %v656
        %v658 = vand.u32 %v657, 4294901760
        %v659 = vsub.f32 %v657, %v658
        %v660 = vand.u32 %v659, 4294901760
        %661 = vmatpush2.msra.mxu0 %v660
        %662 = vmatprep.subr.mxu0 0.0
        %v663 = vand.u32 %v406, 4294901760
        %v664 = vsub.f32 %v406, %v663
        %v665 = vand.u32 %v664, 4294901760
        %v666 = vsub.f32 %v664, %v665
        %v667 = vand.u32 %v666, 4294901760
        %668 = vmatpush2.msra.mxu0 %v667
        %669 = vmatprep.subr.mxu0 0.0
        %v670 = vand.u32 %v405, 4294901760
        %v671 = vsub.f32 %v405, %v670
        %v672 = vand.u32 %v671, 4294901760
        %v673 = vsub.f32 %v671, %v672
        %v674 = vand.u32 %v673, 4294901760
        %675 = vmatpush2.msra.mxu0 %v674
        %676 = vmatprep.subr.mxu0 0.0
        %v677 = vand.u32 %v404, 4294901760
        %v678 = vsub.f32 %v404, %v677
        %v679 = vand.u32 %v678, 4294901760
        %v680 = vsub.f32 %v678, %v679
        %v681 = vand.u32 %v680, 4294901760
        %682 = vmatpush2.msra.mxu0 %v681
        %683 = vmatprep.subr.mxu0 0.0
        %v684 = vand.u32 %v403, 4294901760
        %v685 = vsub.f32 %v403, %v684
        %v686 = vand.u32 %v685, 4294901760
        %v687 = vsub.f32 %v685, %v686
        %v688 = vand.u32 %v687, 4294901760
        %689 = vmatpush2.msra.mxu0 %v688
        %690 = vmatprep.subr.mxu0 0.0
        %v691 = vand.u32 %v402, 4294901760
        %v692 = vsub.f32 %v402, %v691
        %v693 = vand.u32 %v692, 4294901760
        %v694 = vsub.f32 %v692, %v693
        %v695 = vand.u32 %v694, 4294901760
        %696 = vmatpush2.msra.mxu0 %v695
        %697 = vmatprep.subr.mxu0 0.0
        %v698 = vand.u32 %v401, 4294901760
        %v699 = vsub.f32 %v401, %v698
        %v700 = vand.u32 %v699, 4294901760
        %v701 = vsub.f32 %v699, %v700
        %v702 = vand.u32 %v701, 4294901760
        %703 = vmatpush2.msra.mxu0 %v702
        %704 = vmatprep.subr.mxu0 0.0
        %v705 = vand.u32 %v400, 4294901760
        %v706 = vsub.f32 %v400, %v705
        %v707 = vand.u32 %v706, 4294901760
        %v708 = vsub.f32 %v706, %v707
        %v709 = vand.u32 %v708, 4294901760
        %710 = vmatpush2.msra.mxu0 %v709
        %711 = vmatprep.subr.mxu0 0.0
        %v712 = vand.u32 %v399, 4294901760
        %v713 = vsub.f32 %v399, %v712
        %v714 = vand.u32 %v713, 4294901760
        %v715 = vsub.f32 %v713, %v714
        %v716 = vand.u32 %v715, 4294901760
        %717 = vmatpush2.msra.mxu0 %v716
        %718 = vmatprep.subr.mxu0 0.0
        %v719 = vand.u32 %v398, 4294901760
        %v720 = vsub.f32 %v398, %v719
        %v721 = vand.u32 %v720, 4294901760
        %v722 = vsub.f32 %v720, %v721
        %v723 = vand.u32 %v722, 4294901760
        %724 = vmatpush2.msra.mxu0 %v723
        %725 = vmatprep.subr.mxu0 0.0
        %v726 = vand.u32 %v397, 4294901760
        %v727 = vsub.f32 %v397, %v726
        %v728 = vand.u32 %v727, 4294901760
        %v729 = vsub.f32 %v727, %v728
        %v730 = vand.u32 %v729, 4294901760
        %731 = vmatpush2.msra.mxu0 %v730
        %732 = vmatprep.subr.mxu0 0.0
        %v733 = vand.u32 %v396, 4294901760
        %v734 = vsub.f32 %v396, %v733
        %v735 = vand.u32 %v734, 4294901760
        %v736 = vsub.f32 %v734, %v735
        %v737 = vand.u32 %v736, 4294901760
        %738 = vmatpush2.msra.mxu0 %v737
        %739 = vmatprep.subr.mxu0 0.0
        %v740 = vand.u32 %v395, 4294901760
        %v741 = vsub.f32 %v395, %v740
        %v742 = vand.u32 %v741, 4294901760
        %v743 = vsub.f32 %v741, %v742
        %v744 = vand.u32 %v743, 4294901760
        %745 = vmatpush2.msra.mxu0 %v744
        %746 = vmatprep.subr.mxu0 0.0
        %v747 = vand.u32 %v394, 4294901760
        %v748 = vsub.f32 %v394, %v747
        %v749 = vand.u32 %v748, 4294901760
        %v750 = vsub.f32 %v748, %v749
        %v751 = vand.u32 %v750, 4294901760
        %752 = vmatpush2.msra.mxu0 %v751
        %753 = vmatprep.subr.mxu0 0.0
        %v754 = vand.u32 %v393, 4294901760
        %v755 = vsub.f32 %v393, %v754
        %v756 = vand.u32 %v755, 4294901760
        %v757 = vsub.f32 %v755, %v756
        %v758 = vand.u32 %v757, 4294901760
        %759 = vmatpush2.msra.mxu0 %v758
        %v760 = vand.u32 %v273, 4294901760
        %761 = vmatprep.mubr.f32.mxu0 %v760
        %v762 = vand.u32 %v272, 4294901760
        %763 = vmatmul.mubr.f32.gmra.mxu0 %v762
        %v764 = vpop.f32.mrf.mxu0
        %v765 = vadd.f32 %v518, %v764
        %v766 = vpop.f32.mrf.mxu0
        %v767 = vand.u32 %v275, 4294901760
        %768 = vmatprep.mubr.f32.mxu0 %v767
        %v769 = vand.u32 %v274, 4294901760
        %770 = vmatmul.mubr.f32.gmra.mxu0 %v769
        %v771 = vpop.f32.mrf.mxu0
        %v772 = vadd.f32 %v533, %v771
        %v773 = vpop.f32.mrf.mxu0
        %774 = vdwg.mxu0
        %775 = vmatprep.subr.mxu0 0.0
        %v776 = vand.u32 %v392, 4294901760
        %v777 = vsub.f32 %v392, %v776
        %778 = vmatpush1.msra.mxu0 %v777
        %779 = vmatprep.subr.mxu0 0.0
        %v780 = vand.u32 %v391, 4294901760
        %v781 = vsub.f32 %v391, %v780
        %782 = vmatpush1.msra.mxu0 %v781
        %783 = vmatprep.subr.mxu0 0.0
        %v784 = vand.u32 %v390, 4294901760
        %v785 = vsub.f32 %v390, %v784
        %786 = vmatpush1.msra.mxu0 %v785
        %787 = vmatprep.subr.mxu0 0.0
        %v788 = vand.u32 %v389, 4294901760
        %v789 = vsub.f32 %v389, %v788
        %790 = vmatpush1.msra.mxu0 %v789
        %791 = vmatprep.subr.mxu0 0.0
        %v792 = vand.u32 %v388, 4294901760
        %v793 = vsub.f32 %v388, %v792
        %794 = vmatpush1.msra.mxu0 %v793
        %795 = vmatprep.subr.mxu0 0.0
        %v796 = vand.u32 %v387, 4294901760
        %v797 = vsub.f32 %v387, %v796
        %798 = vmatpush1.msra.mxu0 %v797
        %799 = vmatprep.subr.mxu0 0.0
        %v800 = vand.u32 %v386, 4294901760
        %v801 = vsub.f32 %v386, %v800
        %802 = vmatpush1.msra.mxu0 %v801
        %803 = vmatprep.subr.mxu0 0.0
        %v804 = vand.u32 %v385, 4294901760
        %v805 = vsub.f32 %v385, %v804
        %806 = vmatpush1.msra.mxu0 %v805
        %807 = vmatprep.subr.mxu0 0.0
        %v808 = vand.u32 %v384, 4294901760
        %v809 = vsub.f32 %v384, %v808
        %810 = vmatpush1.msra.mxu0 %v809
        %811 = vmatprep.subr.mxu0 0.0
        %v812 = vand.u32 %v383, 4294901760
        %v813 = vsub.f32 %v383, %v812
        %814 = vmatpush1.msra.mxu0 %v813
        %815 = vmatprep.subr.mxu0 0.0
        %v816 = vand.u32 %v382, 4294901760
        %v817 = vsub.f32 %v382, %v816
        %818 = vmatpush1.msra.mxu0 %v817
        %819 = vmatprep.subr.mxu0 0.0
        %v820 = vand.u32 %v381, 4294901760
        %v821 = vsub.f32 %v381, %v820
        %822 = vmatpush1.msra.mxu0 %v821
        %823 = vmatprep.subr.mxu0 0.0
        %v824 = vand.u32 %v380, 4294901760
        %v825 = vsub.f32 %v380, %v824
        %826 = vmatpush1.msra.mxu0 %v825
        %827 = vmatprep.subr.mxu0 0.0
        %v828 = vand.u32 %v379, 4294901760
        %v829 = vsub.f32 %v379, %v828
        %830 = vmatpush1.msra.mxu0 %v829
        %831 = vmatprep.subr.mxu0 0.0
        %v832 = vand.u32 %v378, 4294901760
        %v833 = vsub.f32 %v378, %v832
        %834 = vmatpush1.msra.mxu0 %v833
        %835 = vmatprep.subr.mxu0 0.0
        %v836 = vand.u32 %v377, 4294901760
        %v837 = vsub.f32 %v377, %v836
        %838 = vmatpush1.msra.mxu0 %v837
        %839 = vmatprep.subr.mxu0 0.0
        %v840 = vand.u32 %v408, 4294901760
        %v841 = vsub.f32 %v408, %v840
        %842 = vmatpush2.msra.mxu0 %v841
        %843 = vmatprep.subr.mxu0 0.0
        %v844 = vand.u32 %v407, 4294901760
        %v845 = vsub.f32 %v407, %v844
        %846 = vmatpush2.msra.mxu0 %v845
        %847 = vmatprep.subr.mxu0 0.0
        %v848 = vand.u32 %v406, 4294901760
        %v849 = vsub.f32 %v406, %v848
        %850 = vmatpush2.msra.mxu0 %v849
        %851 = vmatprep.subr.mxu0 0.0
        %v852 = vand.u32 %v405, 4294901760
        %v853 = vsub.f32 %v405, %v852
        %854 = vmatpush2.msra.mxu0 %v853
        %855 = vmatprep.subr.mxu0 0.0
        %v856 = vand.u32 %v404, 4294901760
        %v857 = vsub.f32 %v404, %v856
        %858 = vmatpush2.msra.mxu0 %v857
        %859 = vmatprep.subr.mxu0 0.0
        %v860 = vand.u32 %v403, 4294901760
        %v861 = vsub.f32 %v403, %v860
        %862 = vmatpush2.msra.mxu0 %v861
        %863 = vmatprep.subr.mxu0 0.0
        %v864 = vand.u32 %v402, 4294901760
        %v865 = vsub.f32 %v402, %v864
        %866 = vmatpush2.msra.mxu0 %v865
        %867 = vmatprep.subr.mxu0 0.0
        %v868 = vand.u32 %v401, 4294901760
        %v869 = vsub.f32 %v401, %v868
        %870 = vmatpush2.msra.mxu0 %v869
        %871 = vmatprep.subr.mxu0 0.0
        %v872 = vand.u32 %v400, 4294901760
        %v873 = vsub.f32 %v400, %v872
        %874 = vmatpush2.msra.mxu0 %v873
        %875 = vmatprep.subr.mxu0 0.0
        %v876 = vand.u32 %v399, 4294901760
        %v877 = vsub.f32 %v399, %v876
        %878 = vmatpush2.msra.mxu0 %v877
        %879 = vmatprep.subr.mxu0 0.0
        %v880 = vand.u32 %v398, 4294901760
        %v881 = vsub.f32 %v398, %v880
        %882 = vmatpush2.msra.mxu0 %v881
        %883 = vmatprep.subr.mxu0 0.0
        %v884 = vand.u32 %v397, 4294901760
        %v885 = vsub.f32 %v397, %v884
        %886 = vmatpush2.msra.mxu0 %v885
        %887 = vmatprep.subr.mxu0 0.0
        %v888 = vand.u32 %v396, 4294901760
        %v889 = vsub.f32 %v396, %v888
        %890 = vmatpush2.msra.mxu0 %v889
        %891 = vmatprep.subr.mxu0 0.0
        %v892 = vand.u32 %v395, 4294901760
        %v893 = vsub.f32 %v395, %v892
        %894 = vmatpush2.msra.mxu0 %v893
        %895 = vmatprep.subr.mxu0 0.0
        %v896 = vand.u32 %v394, 4294901760
        %v897 = vsub.f32 %v394, %v896
        %898 = vmatpush2.msra.mxu0 %v897
        %899 = vmatprep.subr.mxu0 0.0
        %v900 = vand.u32 %v393, 4294901760
        %v901 = vsub.f32 %v393, %v900
        %902 = vmatpush2.msra.mxu0 %v901
        %v903 = vand.u32 %v273, 4294901760
        %v904 = vsub.f32 %v273, %v903
        %905 = vmatprep.mubr.f32.mxu0 %v904
        %v906 = vand.u32 %v272, 4294901760
        %v907 = vsub.f32 %v272, %v906
        %908 = vmatmul.mubr.f32.gmra.mxu0 %v907
        %v909 = vpop.f32.mrf.mxu0
        %v910 = vadd.f32 %v765, %v909
        %v911 = vpop.f32.mrf.mxu0
        %v912 = vand.u32 %v275, 4294901760
        %v913 = vsub.f32 %v275, %v912
        %914 = vmatprep.mubr.f32.mxu0 %v913
        %v915 = vand.u32 %v274, 4294901760
        %v916 = vsub.f32 %v274, %v915
        %917 = vmatmul.mubr.f32.gmra.mxu0 %v916
        %v918 = vpop.f32.mrf.mxu0
        %v919 = vadd.f32 %v772, %v918
        %v920 = vpop.f32.mrf.mxu0
        %921 = vdwg.mxu0
        %922 = vmatprep.subr.mxu0 0.0
        %v923 = vand.u32 %v392, 4294901760
        %924 = vmatpush1.msra.mxu0 %v923
        %925 = vmatprep.subr.mxu0 0.0
        %v926 = vand.u32 %v391, 4294901760
        %927 = vmatpush1.msra.mxu0 %v926
        %928 = vmatprep.subr.mxu0 0.0
        %v929 = vand.u32 %v390, 4294901760
        %930 = vmatpush1.msra.mxu0 %v929
        %931 = vmatprep.subr.mxu0 0.0
        %v932 = vand.u32 %v389, 4294901760
        %933 = vmatpush1.msra.mxu0 %v932
        %934 = vmatprep.subr.mxu0 0.0
        %v935 = vand.u32 %v388, 4294901760
        %936 = vmatpush1.msra.mxu0 %v935
        %937 = vmatprep.subr.mxu0 0.0
        %v938 = vand.u32 %v387, 4294901760
        %939 = vmatpush1.msra.mxu0 %v938
        %940 = vmatprep.subr.mxu0 0.0
        %v941 = vand.u32 %v386, 4294901760
        %942 = vmatpush1.msra.mxu0 %v941
        %943 = vmatprep.subr.mxu0 0.0
        %v944 = vand.u32 %v385, 4294901760
        %945 = vmatpush1.msra.mxu0 %v944
        %946 = vmatprep.subr.mxu0 0.0
        %v947 = vand.u32 %v384, 4294901760
        %948 = vmatpush1.msra.mxu0 %v947
        %949 = vmatprep.subr.mxu0 0.0
        %v950 = vand.u32 %v383, 4294901760
        %951 = vmatpush1.msra.mxu0 %v950
        %952 = vmatprep.subr.mxu0 0.0
        %v953 = vand.u32 %v382, 4294901760
        %954 = vmatpush1.msra.mxu0 %v953
        %955 = vmatprep.subr.mxu0 0.0
        %v956 = vand.u32 %v381, 4294901760
        %957 = vmatpush1.msra.mxu0 %v956
        %958 = vmatprep.subr.mxu0 0.0
        %v959 = vand.u32 %v380, 4294901760
        %960 = vmatpush1.msra.mxu0 %v959
        %961 = vmatprep.subr.mxu0 0.0
        %v962 = vand.u32 %v379, 4294901760
        %963 = vmatpush1.msra.mxu0 %v962
        %964 = vmatprep.subr.mxu0 0.0
        %v965 = vand.u32 %v378, 4294901760
        %966 = vmatpush1.msra.mxu0 %v965
        %967 = vmatprep.subr.mxu0 0.0
        %v968 = vand.u32 %v377, 4294901760
        %969 = vmatpush1.msra.mxu0 %v968
        %970 = vmatprep.subr.mxu0 0.0
        %v971 = vand.u32 %v408, 4294901760
        %972 = vmatpush2.msra.mxu0 %v971
        %973 = vmatprep.subr.mxu0 0.0
        %v974 = vand.u32 %v407, 4294901760
        %975 = vmatpush2.msra.mxu0 %v974
        %976 = vmatprep.subr.mxu0 0.0
        %v977 = vand.u32 %v406, 4294901760
        %978 = vmatpush2.msra.mxu0 %v977
        %979 = vmatprep.subr.mxu0 0.0
        %v980 = vand.u32 %v405, 4294901760
        %981 = vmatpush2.msra.mxu0 %v980
        %982 = vmatprep.subr.mxu0 0.0
        %v983 = vand.u32 %v404, 4294901760
        %984 = vmatpush2.msra.mxu0 %v983
        %985 = vmatprep.subr.mxu0 0.0
        %v986 = vand.u32 %v403, 4294901760
        %987 = vmatpush2.msra.mxu0 %v986
        %988 = vmatprep.subr.mxu0 0.0
        %v989 = vand.u32 %v402, 4294901760
        %990 = vmatpush2.msra.mxu0 %v989
        %991 = vmatprep.subr.mxu0 0.0
        %v992 = vand.u32 %v401, 4294901760
        %993 = vmatpush2.msra.mxu0 %v992
        %994 = vmatprep.subr.mxu0 0.0
        %v995 = vand.u32 %v400, 4294901760
        %996 = vmatpush2.msra.mxu0 %v995
        %997 = vmatprep.subr.mxu0 0.0
        %v998 = vand.u32 %v399, 4294901760
        %999 = vmatpush2.msra.mxu0 %v998
        %1000 = vmatprep.subr.mxu0 0.0
        %v1001 = vand.u32 %v398, 4294901760
        %1002 = vmatpush2.msra.mxu0 %v1001
        %1003 = vmatprep.subr.mxu0 0.0
        %v1004 = vand.u32 %v397, 4294901760
        %1005 = vmatpush2.msra.mxu0 %v1004
        %1006 = vmatprep.subr.mxu0 0.0
        %v1007 = vand.u32 %v396, 4294901760
        %1008 = vmatpush2.msra.mxu0 %v1007
        %1009 = vmatprep.subr.mxu0 0.0
        %v1010 = vand.u32 %v395, 4294901760
        %1011 = vmatpush2.msra.mxu0 %v1010
        %1012 = vmatprep.subr.mxu0 0.0
        %v1013 = vand.u32 %v394, 4294901760
        %1014 = vmatpush2.msra.mxu0 %v1013
        %1015 = vmatprep.subr.mxu0 0.0
        %v1016 = vand.u32 %v393, 4294901760
        %1017 = vmatpush2.msra.mxu0 %v1016
        %v1018 = vand.u32 %v273, 4294901760
        %v1019 = vsub.f32 %v273, %v1018
        %v1020 = vand.u32 %v1019, 4294901760
        %1021 = vmatprep.mubr.f32.mxu0 %v1020
        %v1022 = vand.u32 %v272, 4294901760
        %v1023 = vsub.f32 %v272, %v1022
        %v1024 = vand.u32 %v1023, 4294901760
        %1025 = vmatmul.mubr.f32.gmra.mxu0 %v1024
        %v1026 = vpop.f32.mrf.mxu0
        %v1027 = vadd.f32 %v910, %v1026
        %v1028 = vpop.f32.mrf.mxu0
        %v1029 = vand.u32 %v275, 4294901760
        %v1030 = vsub.f32 %v275, %v1029
        %v1031 = vand.u32 %v1030, 4294901760
        %1032 = vmatprep.mubr.f32.mxu0 %v1031
        %v1033 = vand.u32 %v274, 4294901760
        %v1034 = vsub.f32 %v274, %v1033
        %v1035 = vand.u32 %v1034, 4294901760
        %1036 = vmatmul.mubr.f32.gmra.mxu0 %v1035
        %v1037 = vpop.f32.mrf.mxu0
        %v1038 = vadd.f32 %v919, %v1037
        %v1039 = vpop.f32.mrf.mxu0
        %1040 = vdwg.mxu0
        %1041 = vmatprep.subr.mxu0 0.0
        %v1042 = vand.u32 %v392, 4294901760
        %v1043 = vsub.f32 %v392, %v1042
        %v1044 = vand.u32 %v1043, 4294901760
        %1045 = vmatpush1.msra.mxu0 %v1044
        %1046 = vmatprep.subr.mxu0 0.0
        %v1047 = vand.u32 %v391, 4294901760
        %v1048 = vsub.f32 %v391, %v1047
        %v1049 = vand.u32 %v1048, 4294901760
        %1050 = vmatpush1.msra.mxu0 %v1049
        %1051 = vmatprep.subr.mxu0 0.0
        %v1052 = vand.u32 %v390, 4294901760
        %v1053 = vsub.f32 %v390, %v1052
        %v1054 = vand.u32 %v1053, 4294901760
        %1055 = vmatpush1.msra.mxu0 %v1054
        %1056 = vmatprep.subr.mxu0 0.0
        %v1057 = vand.u32 %v389, 4294901760
        %v1058 = vsub.f32 %v389, %v1057
        %v1059 = vand.u32 %v1058, 4294901760
        %1060 = vmatpush1.msra.mxu0 %v1059
        %1061 = vmatprep.subr.mxu0 0.0
        %v1062 = vand.u32 %v388, 4294901760
        %v1063 = vsub.f32 %v388, %v1062
        %v1064 = vand.u32 %v1063, 4294901760
        %1065 = vmatpush1.msra.mxu0 %v1064
        %1066 = vmatprep.subr.mxu0 0.0
        %v1067 = vand.u32 %v387, 4294901760
        %v1068 = vsub.f32 %v387, %v1067
        %v1069 = vand.u32 %v1068, 4294901760
        %1070 = vmatpush1.msra.mxu0 %v1069
        %1071 = vmatprep.subr.mxu0 0.0
        %v1072 = vand.u32 %v386, 4294901760
        %v1073 = vsub.f32 %v386, %v1072
        %v1074 = vand.u32 %v1073, 4294901760
        %1075 = vmatpush1.msra.mxu0 %v1074
        %1076 = vmatprep.subr.mxu0 0.0
        %v1077 = vand.u32 %v385, 4294901760
        %v1078 = vsub.f32 %v385, %v1077
        %v1079 = vand.u32 %v1078, 4294901760
        %1080 = vmatpush1.msra.mxu0 %v1079
        %1081 = vmatprep.subr.mxu0 0.0
        %v1082 = vand.u32 %v384, 4294901760
        %v1083 = vsub.f32 %v384, %v1082
        %v1084 = vand.u32 %v1083, 4294901760
        %1085 = vmatpush1.msra.mxu0 %v1084
        %1086 = vmatprep.subr.mxu0 0.0
        %v1087 = vand.u32 %v383, 4294901760
        %v1088 = vsub.f32 %v383, %v1087
        %v1089 = vand.u32 %v1088, 4294901760
        %1090 = vmatpush1.msra.mxu0 %v1089
        %1091 = vmatprep.subr.mxu0 0.0
        %v1092 = vand.u32 %v382, 4294901760
        %v1093 = vsub.f32 %v382, %v1092
        %v1094 = vand.u32 %v1093, 4294901760
        %1095 = vmatpush1.msra.mxu0 %v1094
        %1096 = vmatprep.subr.mxu0 0.0
        %v1097 = vand.u32 %v381, 4294901760
        %v1098 = vsub.f32 %v381, %v1097
        %v1099 = vand.u32 %v1098, 4294901760
        %1100 = vmatpush1.msra.mxu0 %v1099
        %1101 = vmatprep.subr.mxu0 0.0
        %v1102 = vand.u32 %v380, 4294901760
        %v1103 = vsub.f32 %v380, %v1102
        %v1104 = vand.u32 %v1103, 4294901760
        %1105 = vmatpush1.msra.mxu0 %v1104
        %1106 = vmatprep.subr.mxu0 0.0
        %v1107 = vand.u32 %v379, 4294901760
        %v1108 = vsub.f32 %v379, %v1107
        %v1109 = vand.u32 %v1108, 4294901760
        %1110 = vmatpush1.msra.mxu0 %v1109
        %1111 = vmatprep.subr.mxu0 0.0
        %v1112 = vand.u32 %v378, 4294901760
        %v1113 = vsub.f32 %v378, %v1112
        %v1114 = vand.u32 %v1113, 4294901760
        %1115 = vmatpush1.msra.mxu0 %v1114
        %1116 = vmatprep.subr.mxu0 0.0
        %v1117 = vand.u32 %v377, 4294901760
        %v1118 = vsub.f32 %v377, %v1117
        %v1119 = vand.u32 %v1118, 4294901760
        %1120 = vmatpush1.msra.mxu0 %v1119
        %1121 = vmatprep.subr.mxu0 0.0
        %v1122 = vand.u32 %v408, 4294901760
        %v1123 = vsub.f32 %v408, %v1122
        %v1124 = vand.u32 %v1123, 4294901760
        %1125 = vmatpush2.msra.mxu0 %v1124
        %1126 = vmatprep.subr.mxu0 0.0
        %v1127 = vand.u32 %v407, 4294901760
        %v1128 = vsub.f32 %v407, %v1127
        %v1129 = vand.u32 %v1128, 4294901760
        %1130 = vmatpush2.msra.mxu0 %v1129
        %1131 = vmatprep.subr.mxu0 0.0
        %v1132 = vand.u32 %v406, 4294901760
        %v1133 = vsub.f32 %v406, %v1132
        %v1134 = vand.u32 %v1133, 4294901760
        %1135 = vmatpush2.msra.mxu0 %v1134
        %1136 = vmatprep.subr.mxu0 0.0
        %v1137 = vand.u32 %v405, 4294901760
        %v1138 = vsub.f32 %v405, %v1137
        %v1139 = vand.u32 %v1138, 4294901760
        %1140 = vmatpush2.msra.mxu0 %v1139
        %1141 = vmatprep.subr.mxu0 0.0
        %v1142 = vand.u32 %v404, 4294901760
        %v1143 = vsub.f32 %v404, %v1142
        %v1144 = vand.u32 %v1143, 4294901760
        %1145 = vmatpush2.msra.mxu0 %v1144
        %1146 = vmatprep.subr.mxu0 0.0
        %v1147 = vand.u32 %v403, 4294901760
        %v1148 = vsub.f32 %v403, %v1147
        %v1149 = vand.u32 %v1148, 4294901760
        %1150 = vmatpush2.msra.mxu0 %v1149
        %1151 = vmatprep.subr.mxu0 0.0
        %v1152 = vand.u32 %v402, 4294901760
        %v1153 = vsub.f32 %v402, %v1152
        %v1154 = vand.u32 %v1153, 4294901760
        %1155 = vmatpush2.msra.mxu0 %v1154
        %1156 = vmatprep.subr.mxu0 0.0
        %v1157 = vand.u32 %v401, 4294901760
        %v1158 = vsub.f32 %v401, %v1157
        %v1159 = vand.u32 %v1158, 4294901760
        %1160 = vmatpush2.msra.mxu0 %v1159
        %1161 = vmatprep.subr.mxu0 0.0
        %v1162 = vand.u32 %v400, 4294901760
        %v1163 = vsub.f32 %v400, %v1162
        %v1164 = vand.u32 %v1163, 4294901760
        %1165 = vmatpush2.msra.mxu0 %v1164
        %1166 = vmatprep.subr.mxu0 0.0
        %v1167 = vand.u32 %v399, 4294901760
        %v1168 = vsub.f32 %v399, %v1167
        %v1169 = vand.u32 %v1168, 4294901760
        %1170 = vmatpush2.msra.mxu0 %v1169
        %1171 = vmatprep.subr.mxu0 0.0
        %v1172 = vand.u32 %v398, 4294901760
        %v1173 = vsub.f32 %v398, %v1172
        %v1174 = vand.u32 %v1173, 4294901760
        %1175 = vmatpush2.msra.mxu0 %v1174
        %1176 = vmatprep.subr.mxu0 0.0
        %v1177 = vand.u32 %v397, 4294901760
        %v1178 = vsub.f32 %v397, %v1177
        %v1179 = vand.u32 %v1178, 4294901760
        %1180 = vmatpush2.msra.mxu0 %v1179
        %1181 = vmatprep.subr.mxu0 0.0
        %v1182 = vand.u32 %v396, 4294901760
        %v1183 = vsub.f32 %v396, %v1182
        %v1184 = vand.u32 %v1183, 4294901760
        %1185 = vmatpush2.msra.mxu0 %v1184
        %1186 = vmatprep.subr.mxu0 0.0
        %v1187 = vand.u32 %v395, 4294901760
        %v1188 = vsub.f32 %v395, %v1187
        %v1189 = vand.u32 %v1188, 4294901760
        %1190 = vmatpush2.msra.mxu0 %v1189
        %1191 = vmatprep.subr.mxu0 0.0
        %v1192 = vand.u32 %v394, 4294901760
        %v1193 = vsub.f32 %v394, %v1192
        %v1194 = vand.u32 %v1193, 4294901760
        %1195 = vmatpush2.msra.mxu0 %v1194
        %1196 = vmatprep.subr.mxu0 0.0
        %v1197 = vand.u32 %v393, 4294901760
        %v1198 = vsub.f32 %v393, %v1197
        %v1199 = vand.u32 %v1198, 4294901760
        %1200 = vmatpush2.msra.mxu0 %v1199
        %v1201 = vand.u32 %v273, 4294901760
        %1202 = vmatprep.mubr.f32.mxu0 %v1201
        %v1203 = vand.u32 %v272, 4294901760
        %1204 = vmatmul.mubr.f32.gmra.mxu0 %v1203
        %v1205 = vpop.f32.mrf.mxu0
        %v1206 = vadd.f32 %v1027, %v1205
        %v1207 = vpop.f32.mrf.mxu0
        %v1208 = vand.u32 %v275, 4294901760
        %1209 = vmatprep.mubr.f32.mxu0 %v1208
        %v1210 = vand.u32 %v274, 4294901760
        %1211 = vmatmul.mubr.f32.gmra.mxu0 %v1210
        %v1212 = vpop.f32.mrf.mxu0
        %v1213 = vadd.f32 %v1038, %v1212
        %v1214 = vpop.f32.mrf.mxu0
        %1215 = vdwg.mxu0
        %1216 = vmatprep.subr.mxu0 0.0
        %v1217 = vand.u32 %v392, 4294901760
        %1218 = vmatpush1.msra.mxu0 %v1217
        %1219 = vmatprep.subr.mxu0 0.0
        %v1220 = vand.u32 %v391, 4294901760
        %1221 = vmatpush1.msra.mxu0 %v1220
        %1222 = vmatprep.subr.mxu0 0.0
        %v1223 = vand.u32 %v390, 4294901760
        %1224 = vmatpush1.msra.mxu0 %v1223
        %1225 = vmatprep.subr.mxu0 0.0
        %v1226 = vand.u32 %v389, 4294901760
        %1227 = vmatpush1.msra.mxu0 %v1226
        %1228 = vmatprep.subr.mxu0 0.0
        %v1229 = vand.u32 %v388, 4294901760
        %1230 = vmatpush1.msra.mxu0 %v1229
        %1231 = vmatprep.subr.mxu0 0.0
        %v1232 = vand.u32 %v387, 4294901760
        %1233 = vmatpush1.msra.mxu0 %v1232
        %1234 = vmatprep.subr.mxu0 0.0
        %v1235 = vand.u32 %v386, 4294901760
        %1236 = vmatpush1.msra.mxu0 %v1235
        %1237 = vmatprep.subr.mxu0 0.0
        %v1238 = vand.u32 %v385, 4294901760
        %1239 = vmatpush1.msra.mxu0 %v1238
        %1240 = vmatprep.subr.mxu0 0.0
        %v1241 = vand.u32 %v384, 4294901760
        %1242 = vmatpush1.msra.mxu0 %v1241
        %1243 = vmatprep.subr.mxu0 0.0
        %v1244 = vand.u32 %v383, 4294901760
        %1245 = vmatpush1.msra.mxu0 %v1244
        %1246 = vmatprep.subr.mxu0 0.0
        %v1247 = vand.u32 %v382, 4294901760
        %1248 = vmatpush1.msra.mxu0 %v1247
        %1249 = vmatprep.subr.mxu0 0.0
        %v1250 = vand.u32 %v381, 4294901760
        %1251 = vmatpush1.msra.mxu0 %v1250
        %1252 = vmatprep.subr.mxu0 0.0
        %v1253 = vand.u32 %v380, 4294901760
        %1254 = vmatpush1.msra.mxu0 %v1253
        %1255 = vmatprep.subr.mxu0 0.0
        %v1256 = vand.u32 %v379, 4294901760
        %1257 = vmatpush1.msra.mxu0 %v1256
        %1258 = vmatprep.subr.mxu0 0.0
        %v1259 = vand.u32 %v378, 4294901760
        %1260 = vmatpush1.msra.mxu0 %v1259
        %1261 = vmatprep.subr.mxu0 0.0
        %v1262 = vand.u32 %v377, 4294901760
        %1263 = vmatpush1.msra.mxu0 %v1262
        %1264 = vmatprep.subr.mxu0 0.0
        %v1265 = vand.u32 %v408, 4294901760
        %1266 = vmatpush2.msra.mxu0 %v1265
        %1267 = vmatprep.subr.mxu0 0.0
        %v1268 = vand.u32 %v407, 4294901760
        %1269 = vmatpush2.msra.mxu0 %v1268
        %1270 = vmatprep.subr.mxu0 0.0
        %v1271 = vand.u32 %v406, 4294901760
        %1272 = vmatpush2.msra.mxu0 %v1271
        %1273 = vmatprep.subr.mxu0 0.0
        %v1274 = vand.u32 %v405, 4294901760
        %1275 = vmatpush2.msra.mxu0 %v1274
        %1276 = vmatprep.subr.mxu0 0.0
        %v1277 = vand.u32 %v404, 4294901760
        %1278 = vmatpush2.msra.mxu0 %v1277
        %1279 = vmatprep.subr.mxu0 0.0
        %v1280 = vand.u32 %v403, 4294901760
        %1281 = vmatpush2.msra.mxu0 %v1280
        %1282 = vmatprep.subr.mxu0 0.0
        %v1283 = vand.u32 %v402, 4294901760
        %1284 = vmatpush2.msra.mxu0 %v1283
        %1285 = vmatprep.subr.mxu0 0.0
        %v1286 = vand.u32 %v401, 4294901760
        %1287 = vmatpush2.msra.mxu0 %v1286
        %1288 = vmatprep.subr.mxu0 0.0
        %v1289 = vand.u32 %v400, 4294901760
        %1290 = vmatpush2.msra.mxu0 %v1289
        %1291 = vmatprep.subr.mxu0 0.0
        %v1292 = vand.u32 %v399, 4294901760
        %1293 = vmatpush2.msra.mxu0 %v1292
        %1294 = vmatprep.subr.mxu0 0.0
        %v1295 = vand.u32 %v398, 4294901760
        %1296 = vmatpush2.msra.mxu0 %v1295
        %1297 = vmatprep.subr.mxu0 0.0
        %v1298 = vand.u32 %v397, 4294901760
        %1299 = vmatpush2.msra.mxu0 %v1298
        %1300 = vmatprep.subr.mxu0 0.0
        %v1301 = vand.u32 %v396, 4294901760
        %1302 = vmatpush2.msra.mxu0 %v1301
        %1303 = vmatprep.subr.mxu0 0.0
        %v1304 = vand.u32 %v395, 4294901760
        %1305 = vmatpush2.msra.mxu0 %v1304
        %1306 = vmatprep.subr.mxu0 0.0
        %v1307 = vand.u32 %v394, 4294901760
        %1308 = vmatpush2.msra.mxu0 %v1307
        %1309 = vmatprep.subr.mxu0 0.0
        %v1310 = vand.u32 %v393, 4294901760
        %1311 = vmatpush2.msra.mxu0 %v1310
        %v1312 = vand.u32 %v273, 4294901760
        %1313 = vmatprep.mubr.f32.mxu0 %v1312
        %v1314 = vand.u32 %v272, 4294901760
        %1315 = vmatmul.mubr.f32.gmra.mxu0 %v1314
        %v1316 = vpop.f32.mrf.mxu0
        %v1317 = vadd.f32 %v1206, %v1316
        %v1318 = vpop.f32.mrf.mxu0
        %v1319 = vand.u32 %v275, 4294901760
        %1320 = vmatprep.mubr.f32.mxu0 %v1319
        %v1321 = vand.u32 %v274, 4294901760
        %1322 = vmatmul.mubr.f32.gmra.mxu0 %v1321
        %v1323 = vpop.f32.mrf.mxu0
        %v1324 = vadd.f32 %v1213, %v1323
        %v1325 = vpop.f32.mrf.mxu0
        %1326 = vdwg.mxu0
        %v1327 = vld [vmem:[%s4] sm:$0xff]
        %v1328 = vld [vmem:[%s4 + $0x8] sm:$0xff]
        %v1329 = vld [vmem:[%s4 + $0x10] sm:$0xff]
        %v1330 = vld [vmem:[%s4 + $0x18] sm:$0xff]
        %vm1331 = vcmask 80896
        %v1333 = vsel %vm1331, %v1327, 0
        %v1336 = vsel %vm1331, %v1328, 0
        %v1339 = vsel %vm1331, %v1329, 0
        %v1342 = vsel %vm1331, %v1330, 0
        %vm1344 = vcmask 1041408
        %v1346 = vsel %vm1344, %v1324, 0
        %1348 = vmatprep.subr.mxu0 0.0
        %1349 = vmatpush1.msra.mxu0 0.0
        %1350 = vmatprep.subr.mxu0 0.0
        %1351 = vmatpush1.msra.mxu0 0.0
        %1352 = vmatprep.subr.mxu0 0.0
        %1353 = vmatpush1.msra.mxu0 0.0
        %1354 = vmatprep.subr.mxu0 0.0
        %1355 = vmatpush1.msra.mxu0 0.0
        %1356 = vmatprep.subr.mxu0 0.0
        %1357 = vmatpush1.msra.mxu0 0.0
        %1358 = vmatprep.subr.mxu0 0.0
        %1359 = vmatpush1.msra.mxu0 0.0
        %1360 = vmatprep.subr.mxu0 0.0
        %1361 = vmatpush1.msra.mxu0 0.0
        %1362 = vmatprep.subr.mxu0 0.0
        %1363 = vmatpush1.msra.mxu0 0.0
        %1364 = vmatprep.subr.mxu0 0.0
        %1365 = vmatpush1.msra.mxu0 0.0
        %1366 = vmatprep.subr.mxu0 0.0
        %1367 = vmatpush1.msra.mxu0 0.0
        %1368 = vmatprep.subr.mxu0 0.0
        %1369 = vmatpush1.msra.mxu0 0.0
        %1370 = vmatprep.subr.mxu0 0.0
        %1371 = vmatpush1.msra.mxu0 0.0
        %1372 = vmatprep.subr.mxu0 0.0
        %1373 = vmatpush1.msra.mxu0 0.0
        %1374 = vmatprep.subr.mxu0 0.0
        %1375 = vmatpush1.msra.mxu0 0.0
        %1376 = vmatprep.subr.mxu0 0.0
        %v1377 = vand.u32 %v1346, 4294901760
        %1378 = vmatpush1.msra.mxu0 %v1377
        %1379 = vmatprep.subr.mxu0 0.0
        %v1380 = vand.u32 %v1317, 4294901760
        %1381 = vmatpush1.msra.mxu0 %v1380
        %1382 = vmatprep.subr.mxu0 0.0
        %1383 = vmatpush2.msra.mxu0 0.0
        %1384 = vmatprep.subr.mxu0 0.0
        %1385 = vmatpush2.msra.mxu0 0.0
        %1386 = vmatprep.subr.mxu0 0.0
        %1387 = vmatpush2.msra.mxu0 0.0
        %1388 = vmatprep.subr.mxu0 0.0
        %1389 = vmatpush2.msra.mxu0 0.0
        %1390 = vmatprep.subr.mxu0 0.0
        %1391 = vmatpush2.msra.mxu0 0.0
        %1392 = vmatprep.subr.mxu0 0.0
        %1393 = vmatpush2.msra.mxu0 0.0
        %1394 = vmatprep.subr.mxu0 0.0
        %1395 = vmatpush2.msra.mxu0 0.0
        %1396 = vmatprep.subr.mxu0 0.0
        %1397 = vmatpush2.msra.mxu0 0.0
        %1398 = vmatprep.subr.mxu0 0.0
        %1399 = vmatpush2.msra.mxu0 0.0
        %1400 = vmatprep.subr.mxu0 0.0
        %1401 = vmatpush2.msra.mxu0 0.0
        %1402 = vmatprep.subr.mxu0 0.0
        %1403 = vmatpush2.msra.mxu0 0.0
        %1404 = vmatprep.subr.mxu0 0.0
        %1405 = vmatpush2.msra.mxu0 0.0
        %1406 = vmatprep.subr.mxu0 0.0
        %1407 = vmatpush2.msra.mxu0 0.0
        %1408 = vmatprep.subr.mxu0 0.0
        %1409 = vmatpush2.msra.mxu0 0.0
        %1410 = vmatprep.subr.mxu0 0.0
        %1411 = vmatpush2.msra.mxu0 0.0
        %1412 = vmatprep.subr.mxu0 0.0
        %1413 = vmatpush2.msra.mxu0 0.0
        %1414 = vmatprep.mubr.f32.mxu0 0.0
        %v1415 = vand.u32 %v1333, 4294901760
        %v1416 = vsub.f32 %v1333, %v1415
        %v1417 = vand.u32 %v1416, 4294901760
        %v1418 = vsub.f32 %v1416, %v1417
        %v1419 = vand.u32 %v1418, 4294901760
        %1420 = vmatmul.mubr.f32.gmra.mxu0 %v1419
        %v1421 = vpop.f32.mrf.mxu0
        %v1422 = vadd.f32 0.0, %v1421
        %v1423 = vpop.f32.mrf.mxu0
        %1424 = vmatprep.mubr.f32.mxu0 0.0
        %v1425 = vand.u32 %v1336, 4294901760
        %v1426 = vsub.f32 %v1336, %v1425
        %v1427 = vand.u32 %v1426, 4294901760
        %v1428 = vsub.f32 %v1426, %v1427
        %v1429 = vand.u32 %v1428, 4294901760
        %1430 = vmatmul.mubr.f32.gmra.mxu0 %v1429
        %v1431 = vpop.f32.mrf.mxu0
        %v1432 = vadd.f32 0.0, %v1431
        %v1433 = vpop.f32.mrf.mxu0
        %1434 = vmatprep.mubr.f32.mxu0 0.0
        %v1435 = vand.u32 %v1339, 4294901760
        %v1436 = vsub.f32 %v1339, %v1435
        %v1437 = vand.u32 %v1436, 4294901760
        %v1438 = vsub.f32 %v1436, %v1437
        %v1439 = vand.u32 %v1438, 4294901760
        %1440 = vmatmul.mubr.f32.gmra.mxu0 %v1439
        %v1441 = vpop.f32.mrf.mxu0
        %v1442 = vadd.f32 0.0, %v1441
        %v1443 = vpop.f32.mrf.mxu0
        %1444 = vmatprep.mubr.f32.mxu0 0.0
        %v1445 = vand.u32 %v1342, 4294901760
        %v1446 = vsub.f32 %v1342, %v1445
        %v1447 = vand.u32 %v1446, 4294901760
        %v1448 = vsub.f32 %v1446, %v1447
        %v1449 = vand.u32 %v1448, 4294901760
        %1450 = vmatmul.mubr.f32.gmra.mxu0 %v1449
        %v1451 = vpop.f32.mrf.mxu0
        %v1452 = vadd.f32 0.0, %v1451
        %v1453 = vpop.f32.mrf.mxu0
        %1454 = vdwg.mxu0
        %1455 = vmatprep.subr.mxu0 0.0
        %1456 = vmatpush1.msra.mxu0 0.0
        %1457 = vmatprep.subr.mxu0 0.0
        %1458 = vmatpush1.msra.mxu0 0.0
        %1459 = vmatprep.subr.mxu0 0.0
        %1460 = vmatpush1.msra.mxu0 0.0
        %1461 = vmatprep.subr.mxu0 0.0
        %1462 = vmatpush1.msra.mxu0 0.0
        %1463 = vmatprep.subr.mxu0 0.0
        %1464 = vmatpush1.msra.mxu0 0.0
        %1465 = vmatprep.subr.mxu0 0.0
        %1466 = vmatpush1.msra.mxu0 0.0
        %1467 = vmatprep.subr.mxu0 0.0
        %1468 = vmatpush1.msra.mxu0 0.0
        %1469 = vmatprep.subr.mxu0 0.0
        %1470 = vmatpush1.msra.mxu0 0.0
        %1471 = vmatprep.subr.mxu0 0.0
        %1472 = vmatpush1.msra.mxu0 0.0
        %1473 = vmatprep.subr.mxu0 0.0
        %1474 = vmatpush1.msra.mxu0 0.0
        %1475 = vmatprep.subr.mxu0 0.0
        %1476 = vmatpush1.msra.mxu0 0.0
        %1477 = vmatprep.subr.mxu0 0.0
        %1478 = vmatpush1.msra.mxu0 0.0
        %1479 = vmatprep.subr.mxu0 0.0
        %1480 = vmatpush1.msra.mxu0 0.0
        %1481 = vmatprep.subr.mxu0 0.0
        %1482 = vmatpush1.msra.mxu0 0.0
        %1483 = vmatprep.subr.mxu0 0.0
        %v1484 = vand.u32 %v1346, 4294901760
        %v1485 = vsub.f32 %v1346, %v1484
        %v1486 = vand.u32 %v1485, 4294901760
        %v1487 = vsub.f32 %v1485, %v1486
        %v1488 = vand.u32 %v1487, 4294901760
        %1489 = vmatpush1.msra.mxu0 %v1488
        %1490 = vmatprep.subr.mxu0 0.0
        %v1491 = vand.u32 %v1317, 4294901760
        %v1492 = vsub.f32 %v1317, %v1491
        %v1493 = vand.u32 %v1492, 4294901760
        %v1494 = vsub.f32 %v1492, %v1493
        %v1495 = vand.u32 %v1494, 4294901760
        %1496 = vmatpush1.msra.mxu0 %v1495
        %1497 = vmatprep.subr.mxu0 0.0
        %1498 = vmatpush2.msra.mxu0 0.0
        %1499 = vmatprep.subr.mxu0 0.0
        %1500 = vmatpush2.msra.mxu0 0.0
        %1501 = vmatprep.subr.mxu0 0.0
        %1502 = vmatpush2.msra.mxu0 0.0
        %1503 = vmatprep.subr.mxu0 0.0
        %1504 = vmatpush2.msra.mxu0 0.0
        %1505 = vmatprep.subr.mxu0 0.0
        %1506 = vmatpush2.msra.mxu0 0.0
        %1507 = vmatprep.subr.mxu0 0.0
        %1508 = vmatpush2.msra.mxu0 0.0
        %1509 = vmatprep.subr.mxu0 0.0
        %1510 = vmatpush2.msra.mxu0 0.0
        %1511 = vmatprep.subr.mxu0 0.0
        %1512 = vmatpush2.msra.mxu0 0.0
        %1513 = vmatprep.subr.mxu0 0.0
        %1514 = vmatpush2.msra.mxu0 0.0
        %1515 = vmatprep.subr.mxu0 0.0
        %1516 = vmatpush2.msra.mxu0 0.0
        %1517 = vmatprep.subr.mxu0 0.0
        %1518 = vmatpush2.msra.mxu0 0.0
        %1519 = vmatprep.subr.mxu0 0.0
        %1520 = vmatpush2.msra.mxu0 0.0
        %1521 = vmatprep.subr.mxu0 0.0
        %1522 = vmatpush2.msra.mxu0 0.0
        %1523 = vmatprep.subr.mxu0 0.0
        %1524 = vmatpush2.msra.mxu0 0.0
        %1525 = vmatprep.subr.mxu0 0.0
        %1526 = vmatpush2.msra.mxu0 0.0
        %1527 = vmatprep.subr.mxu0 0.0
        %1528 = vmatpush2.msra.mxu0 0.0
        %1529 = vmatprep.mubr.f32.mxu0 0.0
        %v1530 = vand.u32 %v1333, 4294901760
        %1531 = vmatmul.mubr.f32.gmra.mxu0 %v1530
        %v1532 = vpop.f32.mrf.mxu0
        %v1533 = vadd.f32 %v1422, %v1532
        %v1534 = vpop.f32.mrf.mxu0
        %1535 = vmatprep.mubr.f32.mxu0 0.0
        %v1536 = vand.u32 %v1336, 4294901760
        %1537 = vmatmul.mubr.f32.gmra.mxu0 %v1536
        %v1538 = vpop.f32.mrf.mxu0
        %v1539 = vadd.f32 %v1432, %v1538
        %v1540 = vpop.f32.mrf.mxu0
        %1541 = vmatprep.mubr.f32.mxu0 0.0
        %v1542 = vand.u32 %v1339, 4294901760
        %1543 = vmatmul.mubr.f32.gmra.mxu0 %v1542
        %v1544 = vpop.f32.mrf.mxu0
        %v1545 = vadd.f32 %v1442, %v1544
        %v1546 = vpop.f32.mrf.mxu0
        %1547 = vmatprep.mubr.f32.mxu0 0.0
        %v1548 = vand.u32 %v1342, 4294901760
        %1549 = vmatmul.mubr.f32.gmra.mxu0 %v1548
        %v1550 = vpop.f32.mrf.mxu0
        %v1551 = vadd.f32 %v1452, %v1550
        %v1552 = vpop.f32.mrf.mxu0
        %1553 = vdwg.mxu0
        %1554 = vmatprep.subr.mxu0 0.0
        %1555 = vmatpush1.msra.mxu0 0.0
        %1556 = vmatprep.subr.mxu0 0.0
        %1557 = vmatpush1.msra.mxu0 0.0
        %1558 = vmatprep.subr.mxu0 0.0
        %1559 = vmatpush1.msra.mxu0 0.0
        %1560 = vmatprep.subr.mxu0 0.0
        %1561 = vmatpush1.msra.mxu0 0.0
        %1562 = vmatprep.subr.mxu0 0.0
        %1563 = vmatpush1.msra.mxu0 0.0
        %1564 = vmatprep.subr.mxu0 0.0
        %1565 = vmatpush1.msra.mxu0 0.0
        %1566 = vmatprep.subr.mxu0 0.0
        %1567 = vmatpush1.msra.mxu0 0.0
        %1568 = vmatprep.subr.mxu0 0.0
        %1569 = vmatpush1.msra.mxu0 0.0
        %1570 = vmatprep.subr.mxu0 0.0
        %1571 = vmatpush1.msra.mxu0 0.0
        %1572 = vmatprep.subr.mxu0 0.0
        %1573 = vmatpush1.msra.mxu0 0.0
        %1574 = vmatprep.subr.mxu0 0.0
        %1575 = vmatpush1.msra.mxu0 0.0
        %1576 = vmatprep.subr.mxu0 0.0
        %1577 = vmatpush1.msra.mxu0 0.0
        %1578 = vmatprep.subr.mxu0 0.0
        %1579 = vmatpush1.msra.mxu0 0.0
        %1580 = vmatprep.subr.mxu0 0.0
        %1581 = vmatpush1.msra.mxu0 0.0
        %1582 = vmatprep.subr.mxu0 0.0
        %v1583 = vand.u32 %v1346, 4294901760
        %v1584 = vsub.f32 %v1346, %v1583
        %1585 = vmatpush1.msra.mxu0 %v1584
        %1586 = vmatprep.subr.mxu0 0.0
        %v1587 = vand.u32 %v1317, 4294901760
        %v1588 = vsub.f32 %v1317, %v1587
        %1589 = vmatpush1.msra.mxu0 %v1588
        %1590 = vmatprep.subr.mxu0 0.0
        %1591 = vmatpush2.msra.mxu0 0.0
        %1592 = vmatprep.subr.mxu0 0.0
        %1593 = vmatpush2.msra.mxu0 0.0
        %1594 = vmatprep.subr.mxu0 0.0
        %1595 = vmatpush2.msra.mxu0 0.0
        %1596 = vmatprep.subr.mxu0 0.0
        %1597 = vmatpush2.msra.mxu0 0.0
        %1598 = vmatprep.subr.mxu0 0.0
        %1599 = vmatpush2.msra.mxu0 0.0
        %1600 = vmatprep.subr.mxu0 0.0
        %1601 = vmatpush2.msra.mxu0 0.0
        %1602 = vmatprep.subr.mxu0 0.0
        %1603 = vmatpush2.msra.mxu0 0.0
        %1604 = vmatprep.subr.mxu0 0.0
        %1605 = vmatpush2.msra.mxu0 0.0
        %1606 = vmatprep.subr.mxu0 0.0
        %1607 = vmatpush2.msra.mxu0 0.0
        %1608 = vmatprep.subr.mxu0 0.0
        %1609 = vmatpush2.msra.mxu0 0.0
        %1610 = vmatprep.subr.mxu0 0.0
        %1611 = vmatpush2.msra.mxu0 0.0
        %1612 = vmatprep.subr.mxu0 0.0
        %1613 = vmatpush2.msra.mxu0 0.0
        %1614 = vmatprep.subr.mxu0 0.0
        %1615 = vmatpush2.msra.mxu0 0.0
        %1616 = vmatprep.subr.mxu0 0.0
        %1617 = vmatpush2.msra.mxu0 0.0
        %1618 = vmatprep.subr.mxu0 0.0
        %1619 = vmatpush2.msra.mxu0 0.0
        %1620 = vmatprep.subr.mxu0 0.0
        %1621 = vmatpush2.msra.mxu0 0.0
        %1622 = vmatprep.mubr.f32.mxu0 0.0
        %v1623 = vand.u32 %v1333, 4294901760
        %v1624 = vsub.f32 %v1333, %v1623
        %1625 = vmatmul.mubr.f32.gmra.mxu0 %v1624
        %v1626 = vpop.f32.mrf.mxu0
        %v1627 = vadd.f32 %v1533, %v1626
        %v1628 = vpop.f32.mrf.mxu0
        %1629 = vmatprep.mubr.f32.mxu0 0.0
        %v1630 = vand.u32 %v1336, 4294901760
        %v1631 = vsub.f32 %v1336, %v1630
        %1632 = vmatmul.mubr.f32.gmra.mxu0 %v1631
        %v1633 = vpop.f32.mrf.mxu0
        %v1634 = vadd.f32 %v1539, %v1633
        %v1635 = vpop.f32.mrf.mxu0
        %1636 = vmatprep.mubr.f32.mxu0 0.0
        %v1637 = vand.u32 %v1339, 4294901760
        %v1638 = vsub.f32 %v1339, %v1637
        %1639 = vmatmul.mubr.f32.gmra.mxu0 %v1638
        %v1640 = vpop.f32.mrf.mxu0
        %v1641 = vadd.f32 %v1545, %v1640
        %v1642 = vpop.f32.mrf.mxu0
        %1643 = vmatprep.mubr.f32.mxu0 0.0
        %v1644 = vand.u32 %v1342, 4294901760
        %v1645 = vsub.f32 %v1342, %v1644
        %1646 = vmatmul.mubr.f32.gmra.mxu0 %v1645
        %v1647 = vpop.f32.mrf.mxu0
        %v1648 = vadd.f32 %v1551, %v1647
        %v1649 = vpop.f32.mrf.mxu0
        %1650 = vdwg.mxu0
        %1651 = vmatprep.subr.mxu0 0.0
        %1652 = vmatpush1.msra.mxu0 0.0
        %1653 = vmatprep.subr.mxu0 0.0
        %1654 = vmatpush1.msra.mxu0 0.0
        %1655 = vmatprep.subr.mxu0 0.0
        %1656 = vmatpush1.msra.mxu0 0.0
        %1657 = vmatprep.subr.mxu0 0.0
        %1658 = vmatpush1.msra.mxu0 0.0
        %1659 = vmatprep.subr.mxu0 0.0
        %1660 = vmatpush1.msra.mxu0 0.0
        %1661 = vmatprep.subr.mxu0 0.0
        %1662 = vmatpush1.msra.mxu0 0.0
        %1663 = vmatprep.subr.mxu0 0.0
        %1664 = vmatpush1.msra.mxu0 0.0
        %1665 = vmatprep.subr.mxu0 0.0
        %1666 = vmatpush1.msra.mxu0 0.0
        %1667 = vmatprep.subr.mxu0 0.0
        %1668 = vmatpush1.msra.mxu0 0.0
        %1669 = vmatprep.subr.mxu0 0.0
        %1670 = vmatpush1.msra.mxu0 0.0
        %1671 = vmatprep.subr.mxu0 0.0
        %1672 = vmatpush1.msra.mxu0 0.0
        %1673 = vmatprep.subr.mxu0 0.0
        %1674 = vmatpush1.msra.mxu0 0.0
        %1675 = vmatprep.subr.mxu0 0.0
        %1676 = vmatpush1.msra.mxu0 0.0
        %1677 = vmatprep.subr.mxu0 0.0
        %1678 = vmatpush1.msra.mxu0 0.0
        %1679 = vmatprep.subr.mxu0 0.0
        %v1680 = vand.u32 %v1346, 4294901760
        %1681 = vmatpush1.msra.mxu0 %v1680
        %1682 = vmatprep.subr.mxu0 0.0
        %v1683 = vand.u32 %v1317, 4294901760
        %1684 = vmatpush1.msra.mxu0 %v1683
        %1685 = vmatprep.subr.mxu0 0.0
        %1686 = vmatpush2.msra.mxu0 0.0
        %1687 = vmatprep.subr.mxu0 0.0
        %1688 = vmatpush2.msra.mxu0 0.0
        %1689 = vmatprep.subr.mxu0 0.0
        %1690 = vmatpush2.msra.mxu0 0.0
        %1691 = vmatprep.subr.mxu0 0.0
        %1692 = vmatpush2.msra.mxu0 0.0
        %1693 = vmatprep.subr.mxu0 0.0
        %1694 = vmatpush2.msra.mxu0 0.0
        %1695 = vmatprep.subr.mxu0 0.0
        %1696 = vmatpush2.msra.mxu0 0.0
        %1697 = vmatprep.subr.mxu0 0.0
        %1698 = vmatpush2.msra.mxu0 0.0
        %1699 = vmatprep.subr.mxu0 0.0
        %1700 = vmatpush2.msra.mxu0 0.0
        %1701 = vmatprep.subr.mxu0 0.0
        %1702 = vmatpush2.msra.mxu0 0.0
        %1703 = vmatprep.subr.mxu0 0.0
        %1704 = vmatpush2.msra.mxu0 0.0
        %1705 = vmatprep.subr.mxu0 0.0
        %1706 = vmatpush2.msra.mxu0 0.0
        %1707 = vmatprep.subr.mxu0 0.0
        %1708 = vmatpush2.msra.mxu0 0.0
        %1709 = vmatprep.subr.mxu0 0.0
        %1710 = vmatpush2.msra.mxu0 0.0
        %1711 = vmatprep.subr.mxu0 0.0
        %1712 = vmatpush2.msra.mxu0 0.0
        %1713 = vmatprep.subr.mxu0 0.0
        %1714 = vmatpush2.msra.mxu0 0.0
        %1715 = vmatprep.subr.mxu0 0.0
        %1716 = vmatpush2.msra.mxu0 0.0
        %1717 = vmatprep.mubr.f32.mxu0 0.0
        %v1718 = vand.u32 %v1333, 4294901760
        %v1719 = vsub.f32 %v1333, %v1718
        %v1720 = vand.u32 %v1719, 4294901760
        %1721 = vmatmul.mubr.f32.gmra.mxu0 %v1720
        %v1722 = vpop.f32.mrf.mxu0
        %v1723 = vadd.f32 %v1627, %v1722
        %v1724 = vpop.f32.mrf.mxu0
        %1725 = vmatprep.mubr.f32.mxu0 0.0
        %v1726 = vand.u32 %v1336, 4294901760
        %v1727 = vsub.f32 %v1336, %v1726
        %v1728 = vand.u32 %v1727, 4294901760
        %1729 = vmatmul.mubr.f32.gmra.mxu0 %v1728
        %v1730 = vpop.f32.mrf.mxu0
        %v1731 = vadd.f32 %v1634, %v1730
        %v1732 = vpop.f32.mrf.mxu0
        %1733 = vmatprep.mubr.f32.mxu0 0.0
        %v1734 = vand.u32 %v1339, 4294901760
        %v1735 = vsub.f32 %v1339, %v1734
        %v1736 = vand.u32 %v1735, 4294901760
        %1737 = vmatmul.mubr.f32.gmra.mxu0 %v1736
        %v1738 = vpop.f32.mrf.mxu0
        %v1739 = vadd.f32 %v1641, %v1738
        %v1740 = vpop.f32.mrf.mxu0
        %1741 = vmatprep.mubr.f32.mxu0 0.0
        %v1742 = vand.u32 %v1342, 4294901760
        %v1743 = vsub.f32 %v1342, %v1742
        %v1744 = vand.u32 %v1743, 4294901760
        %1745 = vmatmul.mubr.f32.gmra.mxu0 %v1744
        %v1746 = vpop.f32.mrf.mxu0
        %v1747 = vadd.f32 %v1648, %v1746
        %v1748 = vpop.f32.mrf.mxu0
        %1749 = vdwg.mxu0
        %1750 = vmatprep.subr.mxu0 0.0
        %1751 = vmatpush1.msra.mxu0 0.0
        %1752 = vmatprep.subr.mxu0 0.0
        %1753 = vmatpush1.msra.mxu0 0.0
        %1754 = vmatprep.subr.mxu0 0.0
        %1755 = vmatpush1.msra.mxu0 0.0
        %1756 = vmatprep.subr.mxu0 0.0
        %1757 = vmatpush1.msra.mxu0 0.0
        %1758 = vmatprep.subr.mxu0 0.0
        %1759 = vmatpush1.msra.mxu0 0.0
        %1760 = vmatprep.subr.mxu0 0.0
        %1761 = vmatpush1.msra.mxu0 0.0
        %1762 = vmatprep.subr.mxu0 0.0
        %1763 = vmatpush1.msra.mxu0 0.0
        %1764 = vmatprep.subr.mxu0 0.0
        %1765 = vmatpush1.msra.mxu0 0.0
        %1766 = vmatprep.subr.mxu0 0.0
        %1767 = vmatpush1.msra.mxu0 0.0
        %1768 = vmatprep.subr.mxu0 0.0
        %1769 = vmatpush1.msra.mxu0 0.0
        %1770 = vmatprep.subr.mxu0 0.0
        %1771 = vmatpush1.msra.mxu0 0.0
        %1772 = vmatprep.subr.mxu0 0.0
        %1773 = vmatpush1.msra.mxu0 0.0
        %1774 = vmatprep.subr.mxu0 0.0
        %1775 = vmatpush1.msra.mxu0 0.0
        %1776 = vmatprep.subr.mxu0 0.0
        %1777 = vmatpush1.msra.mxu0 0.0
        %1778 = vmatprep.subr.mxu0 0.0
        %v1779 = vand.u32 %v1346, 4294901760
        %v1780 = vsub.f32 %v1346, %v1779
        %v1781 = vand.u32 %v1780, 4294901760
        %1782 = vmatpush1.msra.mxu0 %v1781
        %1783 = vmatprep.subr.mxu0 0.0
        %v1784 = vand.u32 %v1317, 4294901760
        %v1785 = vsub.f32 %v1317, %v1784
        %v1786 = vand.u32 %v1785, 4294901760
        %1787 = vmatpush1.msra.mxu0 %v1786
        %1788 = vmatprep.subr.mxu0 0.0
        %1789 = vmatpush2.msra.mxu0 0.0
        %1790 = vmatprep.subr.mxu0 0.0
        %1791 = vmatpush2.msra.mxu0 0.0
        %1792 = vmatprep.subr.mxu0 0.0
        %1793 = vmatpush2.msra.mxu0 0.0
        %1794 = vmatprep.subr.mxu0 0.0
        %1795 = vmatpush2.msra.mxu0 0.0
        %1796 = vmatprep.subr.mxu0 0.0
        %1797 = vmatpush2.msra.mxu0 0.0
        %1798 = vmatprep.subr.mxu0 0.0
        %1799 = vmatpush2.msra.mxu0 0.0
        %1800 = vmatprep.subr.mxu0 0.0
        %1801 = vmatpush2.msra.mxu0 0.0
        %1802 = vmatprep.subr.mxu0 0.0
        %1803 = vmatpush2.msra.mxu0 0.0
        %1804 = vmatprep.subr.mxu0 0.0
        %1805 = vmatpush2.msra.mxu0 0.0
        %1806 = vmatprep.subr.mxu0 0.0
        %1807 = vmatpush2.msra.mxu0 0.0
        %1808 = vmatprep.subr.mxu0 0.0
        %1809 = vmatpush2.msra.mxu0 0.0
        %1810 = vmatprep.subr.mxu0 0.0
        %1811 = vmatpush2.msra.mxu0 0.0
        %1812 = vmatprep.subr.mxu0 0.0
        %1813 = vmatpush2.msra.mxu0 0.0
        %1814 = vmatprep.subr.mxu0 0.0
        %1815 = vmatpush2.msra.mxu0 0.0
        %1816 = vmatprep.subr.mxu0 0.0
        %1817 = vmatpush2.msra.mxu0 0.0
        %1818 = vmatprep.subr.mxu0 0.0
        %1819 = vmatpush2.msra.mxu0 0.0
        %1820 = vmatprep.mubr.f32.mxu0 0.0
        %v1821 = vand.u32 %v1333, 4294901760
        %1822 = vmatmul.mubr.f32.gmra.mxu0 %v1821
        %v1823 = vpop.f32.mrf.mxu0
        %v1824 = vadd.f32 %v1723, %v1823
        %v1825 = vpop.f32.mrf.mxu0
        %1826 = vmatprep.mubr.f32.mxu0 0.0
        %v1827 = vand.u32 %v1336, 4294901760
        %1828 = vmatmul.mubr.f32.gmra.mxu0 %v1827
        %v1829 = vpop.f32.mrf.mxu0
        %v1830 = vadd.f32 %v1731, %v1829
        %v1831 = vpop.f32.mrf.mxu0
        %1832 = vmatprep.mubr.f32.mxu0 0.0
        %v1833 = vand.u32 %v1339, 4294901760
        %1834 = vmatmul.mubr.f32.gmra.mxu0 %v1833
        %v1835 = vpop.f32.mrf.mxu0
        %v1836 = vadd.f32 %v1739, %v1835
        %v1837 = vpop.f32.mrf.mxu0
        %1838 = vmatprep.mubr.f32.mxu0 0.0
        %v1839 = vand.u32 %v1342, 4294901760
        %1840 = vmatmul.mubr.f32.gmra.mxu0 %v1839
        %v1841 = vpop.f32.mrf.mxu0
        %v1842 = vadd.f32 %v1747, %v1841
        %v1843 = vpop.f32.mrf.mxu0
        %1844 = vdwg.mxu0
        %1845 = vmatprep.subr.mxu0 0.0
        %1846 = vmatpush1.msra.mxu0 0.0
        %1847 = vmatprep.subr.mxu0 0.0
        %1848 = vmatpush1.msra.mxu0 0.0
        %1849 = vmatprep.subr.mxu0 0.0
        %1850 = vmatpush1.msra.mxu0 0.0
        %1851 = vmatprep.subr.mxu0 0.0
        %1852 = vmatpush1.msra.mxu0 0.0
        %1853 = vmatprep.subr.mxu0 0.0
        %1854 = vmatpush1.msra.mxu0 0.0
        %1855 = vmatprep.subr.mxu0 0.0
        %1856 = vmatpush1.msra.mxu0 0.0
        %1857 = vmatprep.subr.mxu0 0.0
        %1858 = vmatpush1.msra.mxu0 0.0
        %1859 = vmatprep.subr.mxu0 0.0
        %1860 = vmatpush1.msra.mxu0 0.0
        %1861 = vmatprep.subr.mxu0 0.0
        %1862 = vmatpush1.msra.mxu0 0.0
        %1863 = vmatprep.subr.mxu0 0.0
        %1864 = vmatpush1.msra.mxu0 0.0
        %1865 = vmatprep.subr.mxu0 0.0
        %1866 = vmatpush1.msra.mxu0 0.0
        %1867 = vmatprep.subr.mxu0 0.0
        %1868 = vmatpush1.msra.mxu0 0.0
        %1869 = vmatprep.subr.mxu0 0.0
        %1870 = vmatpush1.msra.mxu0 0.0
        %1871 = vmatprep.subr.mxu0 0.0
        %1872 = vmatpush1.msra.mxu0 0.0
        %1873 = vmatprep.subr.mxu0 0.0
        %v1874 = vand.u32 %v1346, 4294901760
        %1875 = vmatpush1.msra.mxu0 %v1874
        %1876 = vmatprep.subr.mxu0 0.0
        %v1877 = vand.u32 %v1317, 4294901760
        %1878 = vmatpush1.msra.mxu0 %v1877
        %1879 = vmatprep.subr.mxu0 0.0
        %1880 = vmatpush2.msra.mxu0 0.0
        %1881 = vmatprep.subr.mxu0 0.0
        %1882 = vmatpush2.msra.mxu0 0.0
        %1883 = vmatprep.subr.mxu0 0.0
        %1884 = vmatpush2.msra.mxu0 0.0
        %1885 = vmatprep.subr.mxu0 0.0
        %1886 = vmatpush2.msra.mxu0 0.0
        %1887 = vmatprep.subr.mxu0 0.0
        %1888 = vmatpush2.msra.mxu0 0.0
        %1889 = vmatprep.subr.mxu0 0.0
        %1890 = vmatpush2.msra.mxu0 0.0
        %1891 = vmatprep.subr.mxu0 0.0
        %1892 = vmatpush2.msra.mxu0 0.0
        %1893 = vmatprep.subr.mxu0 0.0
        %1894 = vmatpush2.msra.mxu0 0.0
        %1895 = vmatprep.subr.mxu0 0.0
        %1896 = vmatpush2.msra.mxu0 0.0
        %1897 = vmatprep.subr.mxu0 0.0
        %1898 = vmatpush2.msra.mxu0 0.0
        %1899 = vmatprep.subr.mxu0 0.0
        %1900 = vmatpush2.msra.mxu0 0.0
        %1901 = vmatprep.subr.mxu0 0.0
        %1902 = vmatpush2.msra.mxu0 0.0
        %1903 = vmatprep.subr.mxu0 0.0
        %1904 = vmatpush2.msra.mxu0 0.0
        %1905 = vmatprep.subr.mxu0 0.0
        %1906 = vmatpush2.msra.mxu0 0.0
        %1907 = vmatprep.subr.mxu0 0.0
        %1908 = vmatpush2.msra.mxu0 0.0
        %1909 = vmatprep.subr.mxu0 0.0
        %1910 = vmatpush2.msra.mxu0 0.0
        %1911 = vmatprep.mubr.f32.mxu0 0.0
        %v1912 = vand.u32 %v1333, 4294901760
        %1913 = vmatmul.mubr.f32.gmra.mxu0 %v1912
        %v1914 = vpop.f32.mrf.mxu0
        %v1915 = vadd.f32 %v1824, %v1914
        %v1916 = vpop.f32.mrf.mxu0
        %1917 = vmatprep.mubr.f32.mxu0 0.0
        %v1918 = vand.u32 %v1336, 4294901760
        %1919 = vmatmul.mubr.f32.gmra.mxu0 %v1918
        %v1920 = vpop.f32.mrf.mxu0
        %v1921 = vadd.f32 %v1830, %v1920
        %v1922 = vpop.f32.mrf.mxu0
        %1923 = vmatprep.mubr.f32.mxu0 0.0
        %v1924 = vand.u32 %v1339, 4294901760
        %1925 = vmatmul.mubr.f32.gmra.mxu0 %v1924
        %v1926 = vpop.f32.mrf.mxu0
        %v1927 = vadd.f32 %v1836, %v1926
        %v1928 = vpop.f32.mrf.mxu0
        %1929 = vmatprep.mubr.f32.mxu0 0.0
        %v1930 = vand.u32 %v1342, 4294901760
        %1931 = vmatmul.mubr.f32.gmra.mxu0 %v1930
        %v1932 = vpop.f32.mrf.mxu0
        %v1933 = vadd.f32 %v1842, %v1932
        %v1934 = vpop.f32.mrf.mxu0
        %1935 = vdwg.mxu0
        %v1936 = vld [vmem:[%s269] sm:$0xff]
        %v1937 = vld [vmem:[%s269 + $0x8] sm:$0x3]
        %v1939 = vsel %vm1344, %v1937, 0
        %1941 = vmatprep.subr.mxu0 0.0
        %1942 = vmatpush1.msra.mxu0 0.0
        %1943 = vmatprep.subr.mxu0 0.0
        %1944 = vmatpush1.msra.mxu0 0.0
        %1945 = vmatprep.subr.mxu0 0.0
        %1946 = vmatpush1.msra.mxu0 0.0
        %1947 = vmatprep.subr.mxu0 0.0
        %1948 = vmatpush1.msra.mxu0 0.0
        %1949 = vmatprep.subr.mxu0 0.0
        %1950 = vmatpush1.msra.mxu0 0.0
        %1951 = vmatprep.subr.mxu0 0.0
        %1952 = vmatpush1.msra.mxu0 0.0
        %1953 = vmatprep.subr.mxu0 0.0
        %1954 = vmatpush1.msra.mxu0 0.0
        %1955 = vmatprep.subr.mxu0 0.0
        %1956 = vmatpush1.msra.mxu0 0.0
        %1957 = vmatprep.subr.mxu0 0.0
        %1958 = vmatpush1.msra.mxu0 0.0
        %1959 = vmatprep.subr.mxu0 0.0
        %1960 = vmatpush1.msra.mxu0 0.0
        %1961 = vmatprep.subr.mxu0 0.0
        %1962 = vmatpush1.msra.mxu0 0.0
        %1963 = vmatprep.subr.mxu0 0.0
        %1964 = vmatpush1.msra.mxu0 0.0
        %1965 = vmatprep.subr.mxu0 0.0
        %1966 = vmatpush1.msra.mxu0 0.0
        %1967 = vmatprep.subr.mxu0 0.0
        %1968 = vmatpush1.msra.mxu0 0.0
        %1969 = vmatprep.subr.mxu0 0.0
        %v1970 = vand.u32 %v1939, 4294901760
        %1971 = vmatpush1.msra.mxu0 %v1970
        %1972 = vmatprep.subr.mxu0 0.0
        %v1973 = vand.u32 %v1936, 4294901760
        %1974 = vmatpush1.msra.mxu0 %v1973
        %1975 = vmatprep.subr.mxu0 0.0
        %1976 = vmatpush2.msra.mxu0 0.0
        %1977 = vmatprep.subr.mxu0 0.0
        %1978 = vmatpush2.msra.mxu0 0.0
        %1979 = vmatprep.subr.mxu0 0.0
        %1980 = vmatpush2.msra.mxu0 0.0
        %1981 = vmatprep.subr.mxu0 0.0
        %1982 = vmatpush2.msra.mxu0 0.0
        %1983 = vmatprep.subr.mxu0 0.0
        %1984 = vmatpush2.msra.mxu0 0.0
        %1985 = vmatprep.subr.mxu0 0.0
        %1986 = vmatpush2.msra.mxu0 0.0
        %1987 = vmatprep.subr.mxu0 0.0
        %1988 = vmatpush2.msra.mxu0 0.0
        %1989 = vmatprep.subr.mxu0 0.0
        %1990 = vmatpush2.msra.mxu0 0.0
        %1991 = vmatprep.subr.mxu0 0.0
        %1992 = vmatpush2.msra.mxu0 0.0
        %1993 = vmatprep.subr.mxu0 0.0
        %1994 = vmatpush2.msra.mxu0 0.0
        %1995 = vmatprep.subr.mxu0 0.0
        %1996 = vmatpush2.msra.mxu0 0.0
        %1997 = vmatprep.subr.mxu0 0.0
        %1998 = vmatpush2.msra.mxu0 0.0
        %1999 = vmatprep.subr.mxu0 0.0
        %2000 = vmatpush2.msra.mxu0 0.0
        %2001 = vmatprep.subr.mxu0 0.0
        %2002 = vmatpush2.msra.mxu0 0.0
        %2003 = vmatprep.subr.mxu0 0.0
        %2004 = vmatpush2.msra.mxu0 0.0
        %2005 = vmatprep.subr.mxu0 0.0
        %2006 = vmatpush2.msra.mxu0 0.0
        %2007 = vmatprep.mubr.f32.mxu0 0.0
        %v2008 = vand.u32 %v1333, 4294901760
        %v2009 = vsub.f32 %v1333, %v2008
        %v2010 = vand.u32 %v2009, 4294901760
        %v2011 = vsub.f32 %v2009, %v2010
        %v2012 = vand.u32 %v2011, 4294901760
        %2013 = vmatmul.mubr.f32.gmra.mxu0 %v2012
        %v2014 = vpop.f32.mrf.mxu0
        %v2015 = vadd.f32 0.0, %v2014
        %v2016 = vpop.f32.mrf.mxu0
        %2017 = vmatprep.mubr.f32.mxu0 0.0
        %v2018 = vand.u32 %v1336, 4294901760
        %v2019 = vsub.f32 %v1336, %v2018
        %v2020 = vand.u32 %v2019, 4294901760
        %v2021 = vsub.f32 %v2019, %v2020
        %v2022 = vand.u32 %v2021, 4294901760
        %2023 = vmatmul.mubr.f32.gmra.mxu0 %v2022
        %v2024 = vpop.f32.mrf.mxu0
        %v2025 = vadd.f32 0.0, %v2024
        %v2026 = vpop.f32.mrf.mxu0
        %2027 = vmatprep.mubr.f32.mxu0 0.0
        %v2028 = vand.u32 %v1339, 4294901760
        %v2029 = vsub.f32 %v1339, %v2028
        %v2030 = vand.u32 %v2029, 4294901760
        %v2031 = vsub.f32 %v2029, %v2030
        %v2032 = vand.u32 %v2031, 4294901760
        %2033 = vmatmul.mubr.f32.gmra.mxu0 %v2032
        %v2034 = vpop.f32.mrf.mxu0
        %v2035 = vadd.f32 0.0, %v2034
        %v2036 = vpop.f32.mrf.mxu0
        %2037 = vmatprep.mubr.f32.mxu0 0.0
        %v2038 = vand.u32 %v1342, 4294901760
        %v2039 = vsub.f32 %v1342, %v2038
        %v2040 = vand.u32 %v2039, 4294901760
        %v2041 = vsub.f32 %v2039, %v2040
        %v2042 = vand.u32 %v2041, 4294901760
        %2043 = vmatmul.mubr.f32.gmra.mxu0 %v2042
        %v2044 = vpop.f32.mrf.mxu0
        %v2045 = vadd.f32 0.0, %v2044
        %v2046 = vpop.f32.mrf.mxu0
        %2047 = vdwg.mxu0
        %2048 = vmatprep.subr.mxu0 0.0
        %2049 = vmatpush1.msra.mxu0 0.0
        %2050 = vmatprep.subr.mxu0 0.0
        %2051 = vmatpush1.msra.mxu0 0.0
        %2052 = vmatprep.subr.mxu0 0.0
        %2053 = vmatpush1.msra.mxu0 0.0
        %2054 = vmatprep.subr.mxu0 0.0
        %2055 = vmatpush1.msra.mxu0 0.0
        %2056 = vmatprep.subr.mxu0 0.0
        %2057 = vmatpush1.msra.mxu0 0.0
        %2058 = vmatprep.subr.mxu0 0.0
        %2059 = vmatpush1.msra.mxu0 0.0
        %2060 = vmatprep.subr.mxu0 0.0
        %2061 = vmatpush1.msra.mxu0 0.0
        %2062 = vmatprep.subr.mxu0 0.0
        %2063 = vmatpush1.msra.mxu0 0.0
        %2064 = vmatprep.subr.mxu0 0.0
        %2065 = vmatpush1.msra.mxu0 0.0
        %2066 = vmatprep.subr.mxu0 0.0
        %2067 = vmatpush1.msra.mxu0 0.0
        %2068 = vmatprep.subr.mxu0 0.0
        %2069 = vmatpush1.msra.mxu0 0.0
        %2070 = vmatprep.subr.mxu0 0.0
        %2071 = vmatpush1.msra.mxu0 0.0
        %2072 = vmatprep.subr.mxu0 0.0
        %2073 = vmatpush1.msra.mxu0 0.0
        %2074 = vmatprep.subr.mxu0 0.0
        %2075 = vmatpush1.msra.mxu0 0.0
        %2076 = vmatprep.subr.mxu0 0.0
        %v2077 = vand.u32 %v1939, 4294901760
        %v2078 = vsub.f32 %v1939, %v2077
        %v2079 = vand.u32 %v2078, 4294901760
        %v2080 = vsub.f32 %v2078, %v2079
        %v2081 = vand.u32 %v2080, 4294901760
        %2082 = vmatpush1.msra.mxu0 %v2081
        %2083 = vmatprep.subr.mxu0 0.0
        %v2084 = vand.u32 %v1936, 4294901760
        %v2085 = vsub.f32 %v1936, %v2084
        %v2086 = vand.u32 %v2085, 4294901760
        %v2087 = vsub.f32 %v2085, %v2086
        %v2088 = vand.u32 %v2087, 4294901760
        %2089 = vmatpush1.msra.mxu0 %v2088
        %2090 = vmatprep.subr.mxu0 0.0
        %2091 = vmatpush2.msra.mxu0 0.0
        %2092 = vmatprep.subr.mxu0 0.0
        %2093 = vmatpush2.msra.mxu0 0.0
        %2094 = vmatprep.subr.mxu0 0.0
        %2095 = vmatpush2.msra.mxu0 0.0
        %2096 = vmatprep.subr.mxu0 0.0
        %2097 = vmatpush2.msra.mxu0 0.0
        %2098 = vmatprep.subr.mxu0 0.0
        %2099 = vmatpush2.msra.mxu0 0.0
        %2100 = vmatprep.subr.mxu0 0.0
        %2101 = vmatpush2.msra.mxu0 0.0
        %2102 = vmatprep.subr.mxu0 0.0
        %2103 = vmatpush2.msra.mxu0 0.0
        %2104 = vmatprep.subr.mxu0 0.0
        %2105 = vmatpush2.msra.mxu0 0.0
        %2106 = vmatprep.subr.mxu0 0.0
        %2107 = vmatpush2.msra.mxu0 0.0
        %2108 = vmatprep.subr.mxu0 0.0
        %2109 = vmatpush2.msra.mxu0 0.0
        %2110 = vmatprep.subr.mxu0 0.0
        %2111 = vmatpush2.msra.mxu0 0.0
        %2112 = vmatprep.subr.mxu0 0.0
        %2113 = vmatpush2.msra.mxu0 0.0
        %2114 = vmatprep.subr.mxu0 0.0
        %2115 = vmatpush2.msra.mxu0 0.0
        %2116 = vmatprep.subr.mxu0 0.0
        %2117 = vmatpush2.msra.mxu0 0.0
        %2118 = vmatprep.subr.mxu0 0.0
        %2119 = vmatpush2.msra.mxu0 0.0
        %2120 = vmatprep.subr.mxu0 0.0
        %2121 = vmatpush2.msra.mxu0 0.0
        %2122 = vmatprep.mubr.f32.mxu0 0.0
        %v2123 = vand.u32 %v1333, 4294901760
        %2124 = vmatmul.mubr.f32.gmra.mxu0 %v2123
        %v2125 = vpop.f32.mrf.mxu0
        %v2126 = vadd.f32 %v2015, %v2125
        %v2127 = vpop.f32.mrf.mxu0
        %2128 = vmatprep.mubr.f32.mxu0 0.0
        %v2129 = vand.u32 %v1336, 4294901760
        %2130 = vmatmul.mubr.f32.gmra.mxu0 %v2129
        %v2131 = vpop.f32.mrf.mxu0
        %v2132 = vadd.f32 %v2025, %v2131
        %v2133 = vpop.f32.mrf.mxu0
        %2134 = vmatprep.mubr.f32.mxu0 0.0
        %v2135 = vand.u32 %v1339, 4294901760
        %2136 = vmatmul.mubr.f32.gmra.mxu0 %v2135
        %v2137 = vpop.f32.mrf.mxu0
        %v2138 = vadd.f32 %v2035, %v2137
        %v2139 = vpop.f32.mrf.mxu0
        %2140 = vmatprep.mubr.f32.mxu0 0.0
        %v2141 = vand.u32 %v1342, 4294901760
        %2142 = vmatmul.mubr.f32.gmra.mxu0 %v2141
        %v2143 = vpop.f32.mrf.mxu0
        %v2144 = vadd.f32 %v2045, %v2143
        %v2145 = vpop.f32.mrf.mxu0
        %2146 = vdwg.mxu0
        %2147 = vmatprep.subr.mxu0 0.0
        %2148 = vmatpush1.msra.mxu0 0.0
        %2149 = vmatprep.subr.mxu0 0.0
        %2150 = vmatpush1.msra.mxu0 0.0
        %2151 = vmatprep.subr.mxu0 0.0
        %2152 = vmatpush1.msra.mxu0 0.0
        %2153 = vmatprep.subr.mxu0 0.0
        %2154 = vmatpush1.msra.mxu0 0.0
        %2155 = vmatprep.subr.mxu0 0.0
        %2156 = vmatpush1.msra.mxu0 0.0
        %2157 = vmatprep.subr.mxu0 0.0
        %2158 = vmatpush1.msra.mxu0 0.0
        %2159 = vmatprep.subr.mxu0 0.0
        %2160 = vmatpush1.msra.mxu0 0.0
        %2161 = vmatprep.subr.mxu0 0.0
        %2162 = vmatpush1.msra.mxu0 0.0
        %2163 = vmatprep.subr.mxu0 0.0
        %2164 = vmatpush1.msra.mxu0 0.0
        %2165 = vmatprep.subr.mxu0 0.0
        %2166 = vmatpush1.msra.mxu0 0.0
        %2167 = vmatprep.subr.mxu0 0.0
        %2168 = vmatpush1.msra.mxu0 0.0
        %2169 = vmatprep.subr.mxu0 0.0
        %2170 = vmatpush1.msra.mxu0 0.0
        %2171 = vmatprep.subr.mxu0 0.0
        %2172 = vmatpush1.msra.mxu0 0.0
        %2173 = vmatprep.subr.mxu0 0.0
        %2174 = vmatpush1.msra.mxu0 0.0
        %2175 = vmatprep.subr.mxu0 0.0
        %v2176 = vand.u32 %v1939, 4294901760
        %v2177 = vsub.f32 %v1939, %v2176
        %2178 = vmatpush1.msra.mxu0 %v2177
        %2179 = vmatprep.subr.mxu0 0.0
        %v2180 = vand.u32 %v1936, 4294901760
        %v2181 = vsub.f32 %v1936, %v2180
        %2182 = vmatpush1.msra.mxu0 %v2181
        %2183 = vmatprep.subr.mxu0 0.0
        %2184 = vmatpush2.msra.mxu0 0.0
        %2185 = vmatprep.subr.mxu0 0.0
        %2186 = vmatpush2.msra.mxu0 0.0
        %2187 = vmatprep.subr.mxu0 0.0
        %2188 = vmatpush2.msra.mxu0 0.0
        %2189 = vmatprep.subr.mxu0 0.0
        %2190 = vmatpush2.msra.mxu0 0.0
        %2191 = vmatprep.subr.mxu0 0.0
        %2192 = vmatpush2.msra.mxu0 0.0
        %2193 = vmatprep.subr.mxu0 0.0
        %2194 = vmatpush2.msra.mxu0 0.0
        %2195 = vmatprep.subr.mxu0 0.0
        %2196 = vmatpush2.msra.mxu0 0.0
        %2197 = vmatprep.subr.mxu0 0.0
        %2198 = vmatpush2.msra.mxu0 0.0
        %2199 = vmatprep.subr.mxu0 0.0
        %2200 = vmatpush2.msra.mxu0 0.0
        %2201 = vmatprep.subr.mxu0 0.0
        %2202 = vmatpush2.msra.mxu0 0.0
        %2203 = vmatprep.subr.mxu0 0.0
        %2204 = vmatpush2.msra.mxu0 0.0
        %2205 = vmatprep.subr.mxu0 0.0
        %2206 = vmatpush2.msra.mxu0 0.0
        %2207 = vmatprep.subr.mxu0 0.0
        %2208 = vmatpush2.msra.mxu0 0.0
        %2209 = vmatprep.subr.mxu0 0.0
        %2210 = vmatpush2.msra.mxu0 0.0
        %2211 = vmatprep.subr.mxu0 0.0
        %2212 = vmatpush2.msra.mxu0 0.0
        %2213 = vmatprep.subr.mxu0 0.0
        %2214 = vmatpush2.msra.mxu0 0.0
        %2215 = vmatprep.mubr.f32.mxu0 0.0
        %v2216 = vand.u32 %v1333, 4294901760
        %v2217 = vsub.f32 %v1333, %v2216
        %2218 = vmatmul.mubr.f32.gmra.mxu0 %v2217
        %v2219 = vpop.f32.mrf.mxu0
        %v2220 = vadd.f32 %v2126, %v2219
        %v2221 = vpop.f32.mrf.mxu0
        %2222 = vmatprep.mubr.f32.mxu0 0.0
        %v2223 = vand.u32 %v1336, 4294901760
        %v2224 = vsub.f32 %v1336, %v2223
        %2225 = vmatmul.mubr.f32.gmra.mxu0 %v2224
        %v2226 = vpop.f32.mrf.mxu0
        %v2227 = vadd.f32 %v2132, %v2226
        %v2228 = vpop.f32.mrf.mxu0
        %2229 = vmatprep.mubr.f32.mxu0 0.0
        %v2230 = vand.u32 %v1339, 4294901760
        %v2231 = vsub.f32 %v1339, %v2230
        %2232 = vmatmul.mubr.f32.gmra.mxu0 %v2231
        %v2233 = vpop.f32.mrf.mxu0
        %v2234 = vadd.f32 %v2138, %v2233
        %v2235 = vpop.f32.mrf.mxu0
        %2236 = vmatprep.mubr.f32.mxu0 0.0
        %v2237 = vand.u32 %v1342, 4294901760
        %v2238 = vsub.f32 %v1342, %v2237
        %2239 = vmatmul.mubr.f32.gmra.mxu0 %v2238
        %v2240 = vpop.f32.mrf.mxu0
        %v2241 = vadd.f32 %v2144, %v2240
        %v2242 = vpop.f32.mrf.mxu0
        %2243 = vdwg.mxu0
        %2244 = vmatprep.subr.mxu0 0.0
        %2245 = vmatpush1.msra.mxu0 0.0
        %2246 = vmatprep.subr.mxu0 0.0
        %2247 = vmatpush1.msra.mxu0 0.0
        %2248 = vmatprep.subr.mxu0 0.0
        %2249 = vmatpush1.msra.mxu0 0.0
        %2250 = vmatprep.subr.mxu0 0.0
        %2251 = vmatpush1.msra.mxu0 0.0
        %2252 = vmatprep.subr.mxu0 0.0
        %2253 = vmatpush1.msra.mxu0 0.0
        %2254 = vmatprep.subr.mxu0 0.0
        %2255 = vmatpush1.msra.mxu0 0.0
        %2256 = vmatprep.subr.mxu0 0.0
        %2257 = vmatpush1.msra.mxu0 0.0
        %2258 = vmatprep.subr.mxu0 0.0
        %2259 = vmatpush1.msra.mxu0 0.0
        %2260 = vmatprep.subr.mxu0 0.0
        %2261 = vmatpush1.msra.mxu0 0.0
        %2262 = vmatprep.subr.mxu0 0.0
        %2263 = vmatpush1.msra.mxu0 0.0
        %2264 = vmatprep.subr.mxu0 0.0
        %2265 = vmatpush1.msra.mxu0 0.0
        %2266 = vmatprep.subr.mxu0 0.0
        %2267 = vmatpush1.msra.mxu0 0.0
        %2268 = vmatprep.subr.mxu0 0.0
        %2269 = vmatpush1.msra.mxu0 0.0
        %2270 = vmatprep.subr.mxu0 0.0
        %2271 = vmatpush1.msra.mxu0 0.0
        %2272 = vmatprep.subr.mxu0 0.0
        %v2273 = vand.u32 %v1939, 4294901760
        %2274 = vmatpush1.msra.mxu0 %v2273
        %2275 = vmatprep.subr.mxu0 0.0
        %v2276 = vand.u32 %v1936, 4294901760
        %2277 = vmatpush1.msra.mxu0 %v2276
        %2278 = vmatprep.subr.mxu0 0.0
        %2279 = vmatpush2.msra.mxu0 0.0
        %2280 = vmatprep.subr.mxu0 0.0
        %2281 = vmatpush2.msra.mxu0 0.0
        %2282 = vmatprep.subr.mxu0 0.0
        %2283 = vmatpush2.msra.mxu0 0.0
        %2284 = vmatprep.subr.mxu0 0.0
        %2285 = vmatpush2.msra.mxu0 0.0
        %2286 = vmatprep.subr.mxu0 0.0
        %2287 = vmatpush2.msra.mxu0 0.0
        %2288 = vmatprep.subr.mxu0 0.0
        %2289 = vmatpush2.msra.mxu0 0.0
        %2290 = vmatprep.subr.mxu0 0.0
        %2291 = vmatpush2.msra.mxu0 0.0
        %2292 = vmatprep.subr.mxu0 0.0
        %2293 = vmatpush2.msra.mxu0 0.0
        %2294 = vmatprep.subr.mxu0 0.0
        %2295 = vmatpush2.msra.mxu0 0.0
        %2296 = vmatprep.subr.mxu0 0.0
        %2297 = vmatpush2.msra.mxu0 0.0
        %2298 = vmatprep.subr.mxu0 0.0
        %2299 = vmatpush2.msra.mxu0 0.0
        %2300 = vmatprep.subr.mxu0 0.0
        %2301 = vmatpush2.msra.mxu0 0.0
        %2302 = vmatprep.subr.mxu0 0.0
        %2303 = vmatpush2.msra.mxu0 0.0
        %2304 = vmatprep.subr.mxu0 0.0
        %2305 = vmatpush2.msra.mxu0 0.0
        %2306 = vmatprep.subr.mxu0 0.0
        %2307 = vmatpush2.msra.mxu0 0.0
        %2308 = vmatprep.subr.mxu0 0.0
        %2309 = vmatpush2.msra.mxu0 0.0
        %2310 = vmatprep.mubr.f32.mxu0 0.0
        %v2311 = vand.u32 %v1333, 4294901760
        %v2312 = vsub.f32 %v1333, %v2311
        %v2313 = vand.u32 %v2312, 4294901760
        %2314 = vmatmul.mubr.f32.gmra.mxu0 %v2313
        %v2315 = vpop.f32.mrf.mxu0
        %v2316 = vadd.f32 %v2220, %v2315
        %v2317 = vpop.f32.mrf.mxu0
        %2318 = vmatprep.mubr.f32.mxu0 0.0
        %v2319 = vand.u32 %v1336, 4294901760
        %v2320 = vsub.f32 %v1336, %v2319
        %v2321 = vand.u32 %v2320, 4294901760
        %2322 = vmatmul.mubr.f32.gmra.mxu0 %v2321
        %v2323 = vpop.f32.mrf.mxu0
        %v2324 = vadd.f32 %v2227, %v2323
        %v2325 = vpop.f32.mrf.mxu0
        %2326 = vmatprep.mubr.f32.mxu0 0.0
        %v2327 = vand.u32 %v1339, 4294901760
        %v2328 = vsub.f32 %v1339, %v2327
        %v2329 = vand.u32 %v2328, 4294901760
        %2330 = vmatmul.mubr.f32.gmra.mxu0 %v2329
        %v2331 = vpop.f32.mrf.mxu0
        %v2332 = vadd.f32 %v2234, %v2331
        %v2333 = vpop.f32.mrf.mxu0
        %2334 = vmatprep.mubr.f32.mxu0 0.0
        %v2335 = vand.u32 %v1342, 4294901760
        %v2336 = vsub.f32 %v1342, %v2335
        %v2337 = vand.u32 %v2336, 4294901760
        %2338 = vmatmul.mubr.f32.gmra.mxu0 %v2337
        %v2339 = vpop.f32.mrf.mxu0
        %v2340 = vadd.f32 %v2241, %v2339
        %v2341 = vpop.f32.mrf.mxu0
        %2342 = vdwg.mxu0
        %2343 = vmatprep.subr.mxu0 0.0
        %2344 = vmatpush1.msra.mxu0 0.0
        %2345 = vmatprep.subr.mxu0 0.0
        %2346 = vmatpush1.msra.mxu0 0.0
        %2347 = vmatprep.subr.mxu0 0.0
        %2348 = vmatpush1.msra.mxu0 0.0
        %2349 = vmatprep.subr.mxu0 0.0
        %2350 = vmatpush1.msra.mxu0 0.0
        %2351 = vmatprep.subr.mxu0 0.0
        %2352 = vmatpush1.msra.mxu0 0.0
        %2353 = vmatprep.subr.mxu0 0.0
        %2354 = vmatpush1.msra.mxu0 0.0
        %2355 = vmatprep.subr.mxu0 0.0
        %2356 = vmatpush1.msra.mxu0 0.0
        %2357 = vmatprep.subr.mxu0 0.0
        %2358 = vmatpush1.msra.mxu0 0.0
        %2359 = vmatprep.subr.mxu0 0.0
        %2360 = vmatpush1.msra.mxu0 0.0
        %2361 = vmatprep.subr.mxu0 0.0
        %2362 = vmatpush1.msra.mxu0 0.0
        %2363 = vmatprep.subr.mxu0 0.0
        %2364 = vmatpush1.msra.mxu0 0.0
        %2365 = vmatprep.subr.mxu0 0.0
        %2366 = vmatpush1.msra.mxu0 0.0
        %2367 = vmatprep.subr.mxu0 0.0
        %2368 = vmatpush1.msra.mxu0 0.0
        %2369 = vmatprep.subr.mxu0 0.0
        %2370 = vmatpush1.msra.mxu0 0.0
        %2371 = vmatprep.subr.mxu0 0.0
        %v2372 = vand.u32 %v1939, 4294901760
        %v2373 = vsub.f32 %v1939, %v2372
        %v2374 = vand.u32 %v2373, 4294901760
        %2375 = vmatpush1.msra.mxu0 %v2374
        %2376 = vmatprep.subr.mxu0 0.0
        %v2377 = vand.u32 %v1936, 4294901760
        %v2378 = vsub.f32 %v1936, %v2377
        %v2379 = vand.u32 %v2378, 4294901760
        %2380 = vmatpush1.msra.mxu0 %v2379
        %2381 = vmatprep.subr.mxu0 0.0
        %2382 = vmatpush2.msra.mxu0 0.0
        %2383 = vmatprep.subr.mxu0 0.0
        %2384 = vmatpush2.msra.mxu0 0.0
        %2385 = vmatprep.subr.mxu0 0.0
        %2386 = vmatpush2.msra.mxu0 0.0
        %2387 = vmatprep.subr.mxu0 0.0
        %2388 = vmatpush2.msra.mxu0 0.0
        %2389 = vmatprep.subr.mxu0 0.0
        %2390 = vmatpush2.msra.mxu0 0.0
        %2391 = vmatprep.subr.mxu0 0.0
        %2392 = vmatpush2.msra.mxu0 0.0
        %2393 = vmatprep.subr.mxu0 0.0
        %2394 = vmatpush2.msra.mxu0 0.0
        %2395 = vmatprep.subr.mxu0 0.0
        %2396 = vmatpush2.msra.mxu0 0.0
        %2397 = vmatprep.subr.mxu0 0.0
        %2398 = vmatpush2.msra.mxu0 0.0
        %2399 = vmatprep.subr.mxu0 0.0
        %2400 = vmatpush2.msra.mxu0 0.0
        %2401 = vmatprep.subr.mxu0 0.0
        %2402 = vmatpush2.msra.mxu0 0.0
        %2403 = vmatprep.subr.mxu0 0.0
        %2404 = vmatpush2.msra.mxu0 0.0
        %2405 = vmatprep.subr.mxu0 0.0
        %2406 = vmatpush2.msra.mxu0 0.0
        %2407 = vmatprep.subr.mxu0 0.0
        %2408 = vmatpush2.msra.mxu0 0.0
        %2409 = vmatprep.subr.mxu0 0.0
        %2410 = vmatpush2.msra.mxu0 0.0
        %2411 = vmatprep.subr.mxu0 0.0
        %2412 = vmatpush2.msra.mxu0 0.0
        %2413 = vmatprep.mubr.f32.mxu0 0.0
        %v2414 = vand.u32 %v1333, 4294901760
        %2415 = vmatmul.mubr.f32.gmra.mxu0 %v2414
        %v2416 = vpop.f32.mrf.mxu0
        %v2417 = vadd.f32 %v2316, %v2416
        %v2418 = vpop.f32.mrf.mxu0
        %2419 = vmatprep.mubr.f32.mxu0 0.0
        %v2420 = vand.u32 %v1336, 4294901760
        %2421 = vmatmul.mubr.f32.gmra.mxu0 %v2420
        %v2422 = vpop.f32.mrf.mxu0
        %v2423 = vadd.f32 %v2324, %v2422
        %v2424 = vpop.f32.mrf.mxu0
        %2425 = vmatprep.mubr.f32.mxu0 0.0
        %v2426 = vand.u32 %v1339, 4294901760
        %2427 = vmatmul.mubr.f32.gmra.mxu0 %v2426
        %v2428 = vpop.f32.mrf.mxu0
        %v2429 = vadd.f32 %v2332, %v2428
        %v2430 = vpop.f32.mrf.mxu0
        %2431 = vmatprep.mubr.f32.mxu0 0.0
        %v2432 = vand.u32 %v1342, 4294901760
        %2433 = vmatmul.mubr.f32.gmra.mxu0 %v2432
        %v2434 = vpop.f32.mrf.mxu0
        %v2435 = vadd.f32 %v2340, %v2434
        %v2436 = vpop.f32.mrf.mxu0
        %2437 = vdwg.mxu0
        %2438 = vmatprep.subr.mxu0 0.0
        %2439 = vmatpush1.msra.mxu0 0.0
        %2440 = vmatprep.subr.mxu0 0.0
        %2441 = vmatpush1.msra.mxu0 0.0
        %2442 = vmatprep.subr.mxu0 0.0
        %2443 = vmatpush1.msra.mxu0 0.0
        %2444 = vmatprep.subr.mxu0 0.0
        %2445 = vmatpush1.msra.mxu0 0.0
        %2446 = vmatprep.subr.mxu0 0.0
        %2447 = vmatpush1.msra.mxu0 0.0
        %2448 = vmatprep.subr.mxu0 0.0
        %2449 = vmatpush1.msra.mxu0 0.0
        %2450 = vmatprep.subr.mxu0 0.0
        %2451 = vmatpush1.msra.mxu0 0.0
        %2452 = vmatprep.subr.mxu0 0.0
        %2453 = vmatpush1.msra.mxu0 0.0
        %2454 = vmatprep.subr.mxu0 0.0
        %2455 = vmatpush1.msra.mxu0 0.0
        %2456 = vmatprep.subr.mxu0 0.0
        %2457 = vmatpush1.msra.mxu0 0.0
        %2458 = vmatprep.subr.mxu0 0.0
        %2459 = vmatpush1.msra.mxu0 0.0
        %2460 = vmatprep.subr.mxu0 0.0
        %2461 = vmatpush1.msra.mxu0 0.0
        %2462 = vmatprep.subr.mxu0 0.0
        %2463 = vmatpush1.msra.mxu0 0.0
        %2464 = vmatprep.subr.mxu0 0.0
        %2465 = vmatpush1.msra.mxu0 0.0
        %2466 = vmatprep.subr.mxu0 0.0
        %v2467 = vand.u32 %v1939, 4294901760
        %2468 = vmatpush1.msra.mxu0 %v2467
        %2469 = vmatprep.subr.mxu0 0.0
        %v2470 = vand.u32 %v1936, 4294901760
        %2471 = vmatpush1.msra.mxu0 %v2470
        %2472 = vmatprep.subr.mxu0 0.0
        %2473 = vmatpush2.msra.mxu0 0.0
        %2474 = vmatprep.subr.mxu0 0.0
        %2475 = vmatpush2.msra.mxu0 0.0
        %2476 = vmatprep.subr.mxu0 0.0
        %2477 = vmatpush2.msra.mxu0 0.0
        %2478 = vmatprep.subr.mxu0 0.0
        %2479 = vmatpush2.msra.mxu0 0.0
        %2480 = vmatprep.subr.mxu0 0.0
        %2481 = vmatpush2.msra.mxu0 0.0
        %2482 = vmatprep.subr.mxu0 0.0
        %2483 = vmatpush2.msra.mxu0 0.0
        %2484 = vmatprep.subr.mxu0 0.0
        %2485 = vmatpush2.msra.mxu0 0.0
        %2486 = vmatprep.subr.mxu0 0.0
        %2487 = vmatpush2.msra.mxu0 0.0
        %2488 = vmatprep.subr.mxu0 0.0
        %2489 = vmatpush2.msra.mxu0 0.0
        %2490 = vmatprep.subr.mxu0 0.0
        %2491 = vmatpush2.msra.mxu0 0.0
        %2492 = vmatprep.subr.mxu0 0.0
        %2493 = vmatpush2.msra.mxu0 0.0
        %2494 = vmatprep.subr.mxu0 0.0
        %2495 = vmatpush2.msra.mxu0 0.0
        %2496 = vmatprep.subr.mxu0 0.0
        %2497 = vmatpush2.msra.mxu0 0.0
        %2498 = vmatprep.subr.mxu0 0.0
        %2499 = vmatpush2.msra.mxu0 0.0
        %2500 = vmatprep.subr.mxu0 0.0
        %2501 = vmatpush2.msra.mxu0 0.0
        %2502 = vmatprep.subr.mxu0 0.0
        %2503 = vmatpush2.msra.mxu0 0.0
        %2504 = vmatprep.mubr.f32.mxu0 0.0
        %v2505 = vand.u32 %v1333, 4294901760
        %2506 = vmatmul.mubr.f32.gmra.mxu0 %v2505
        %v2507 = vpop.f32.mrf.mxu0
        %v2508 = vadd.f32 %v2417, %v2507
        %v2509 = vpop.f32.mrf.mxu0
        %2510 = vmatprep.mubr.f32.mxu0 0.0
        %v2511 = vand.u32 %v1336, 4294901760
        %2512 = vmatmul.mubr.f32.gmra.mxu0 %v2511
        %v2513 = vpop.f32.mrf.mxu0
        %v2514 = vadd.f32 %v2423, %v2513
        %v2515 = vpop.f32.mrf.mxu0
        %2516 = vmatprep.mubr.f32.mxu0 0.0
        %v2517 = vand.u32 %v1339, 4294901760
        %2518 = vmatmul.mubr.f32.gmra.mxu0 %v2517
        %v2519 = vpop.f32.mrf.mxu0
        %v2520 = vadd.f32 %v2429, %v2519
        %v2521 = vpop.f32.mrf.mxu0
        %2522 = vmatprep.mubr.f32.mxu0 0.0
        %v2523 = vand.u32 %v1342, 4294901760
        %2524 = vmatmul.mubr.f32.gmra.mxu0 %v2523
        %v2525 = vpop.f32.mrf.mxu0
        %v2526 = vadd.f32 %v2435, %v2525
        %v2527 = vpop.f32.mrf.mxu0
        %2528 = vdwg.mxu0
        %v2529 = vsub.f32 %v1915, %v2508
        %v2530 = vsub.f32 %v1921, %v2514
        %v2531 = vsub.f32 %v1927, %v2520
        %v2532 = vsub.f32 %v1933, %v2526
        %v2534 = vlaneseq
        %v2535 = vshrl.u32 %v2534, 7
        %v2536 = vsub.s32 0, %v2535
        %v2537 = vrot.slane %v271, %v2536
        %v2539 = vmul.f32 %v2529, %v2537
        %v2540 = vmul.f32 %v2530, %v2537
        %v2541 = vmul.f32 %v2531, %v2537
        %v2542 = vmul.f32 %v2532, %v2537
        %v2543 = vand.u32 2147483647, %v2539
        %v2544 = vand.u32 2147483647, %v2540
        %v2545 = vand.u32 2147483647, %v2541
        %v2546 = vand.u32 2147483647, %v2542
        %vm2547 = vcmp.lt.f32.partialorder %v2543, 1.0
        %vm2548 = vcmp.lt.f32.partialorder %v2544, 1.0
        %vm2549 = vcmp.lt.f32.partialorder %v2545, 1.0
        %vm2550 = vcmp.lt.f32.partialorder %v2546, 1.0
        %v2551 = vmul.f32 %v2543, 0.5
        %v2552 = vmul.f32 %v2544, 0.5
        %v2553 = vmul.f32 %v2545, 0.5
        %v2554 = vmul.f32 %v2546, 0.5
        %v2555 = vmul.f32 %v2551, %v2543
        %v2556 = vmul.f32 %v2552, %v2544
        %v2557 = vmul.f32 %v2553, %v2545
        %v2558 = vmul.f32 %v2554, %v2546
        %v2559 = vsub.f32 %v2543, 0.5
        %v2560 = vsub.f32 %v2544, 0.5
        %v2561 = vsub.f32 %v2545, 0.5
        %v2562 = vsub.f32 %v2546, 0.5
        %v2563 = vsel %vm2547, %v2555, %v2559
        %v2564 = vsel %vm2548, %v2556, %v2560
        %v2565 = vsel %vm2549, %v2557, %v2561
        %v2566 = vsel %vm2550, %v2558, %v2562
        %vm2567 = vcmask 64512
        %v2568 = vsel %vm2567, %v2563, 0.0
        %v2569 = vsel %vm2567, %v2564, 0.0
        %v2570 = vadd.f32 %v2568, %v2569
        %v2571 = vsel %vm2567, %v2565, 0.0
        %v2572 = vadd.f32 %v2570, %v2571
        %v2573 = vsel %vm2567, %v2566, 0.0
        %v2574 = vadd.f32 %v2572, %v2573
        %2575 = vadd.xlane.f32.xlu0 %v2574
        %v2576 = vpop.xlane.xlu0 %2575
        %v2577 = vrot.slane %v2576, 4
        %v2578 = vadd.f32 %v2576, %v2577
        %v2579 = vrot.slane %v2578, 2
        %v2580 = vadd.f32 %v2578, %v2579
        %v2581 = vrot.slane %v2580, 1
        %v2582 = vadd.f32 %v2580, %v2581
        %s2583 = vtos %v2582
        %vm2584 = vcmask 57344
        %v2585 = vsel %vm2584, %v271, 0.0
        %2586 = vadd.xlane.f32.xlu0 %v2585
        %v2587 = vpop.xlane.xlu0 %2586
        %v2588 = vrot.slane %v2587, 4
        %v2589 = vadd.f32 %v2587, %v2588
        %v2590 = vrot.slane %v2589, 2
        %v2591 = vadd.f32 %v2589, %v2590
        %v2592 = vrot.slane %v2591, 1
        %v2593 = vadd.f32 %v2591, %v2592
        %s2594 = vtos %v2593
        %s2595 = smul.f32 %s2594, 32.0
        %v2596 = vlaneseq
        %v2597 = vand.u32 %v2596, 127
        %vm2598 = vcmp.eq.s32.totalorder %v2597, 0
        %vm2599 = vcmp.eq.s32.totalorder %v2597, 1
        %v2600 = vstv %s2595
        %v2601 = vsel %vm2599, %v2600, 0.0
        %v2602 = vstv %s2583
        %v2603 = vsel %vm2598, %v2602, %v2601
        %2604 = vst [vmem:[%s253] sm:$0x1] %v2603
        %s2605 = sand.u32 %s152, 1
        %s2606 = scalar_lea.sflag [#allocation3], %s2605
        %s2607 = sand.u32 %s152, 1
        %s2608 = scalar_lea.vmem [#allocation2], %s2607
        // Predicated region
        $region41: #{tpu_custom_call.1} parent=39 // pred_check
          %p2609 = pneg %p162
        $region42: #{tpu_custom_call.1} parent=39 // pred_check_branch
          %2611 = sbr.rel (%p2609) target = $region44
        $region43: #{tpu_custom_call.1} parent=39 // pred_region
          %s2613 = ssub.s32 16, 16
          %2614 = vsyncadd %s2606, %s2613
          %s2615 = smul.addr %s19, 16
          %s2616 = scalar_lea.hbm %s5, %s2615
          %s2618 = sshll.u32 %s2608, 4
          %s2619 = int_to_ptr.vmem [resolvable:$true] %s2618
          %2621 = dma.vmem_to_hbm [thread:$0]  %s2619, 16, %s2616, %s2606
        $region44: #{tpu_custom_call.1} parent=39 // pred_fallthru
          _
      $region40: #{tpu_custom_call.1} parent=5 // pred_fallthru
        _
      %p2622 = scmp.le.s32.totalorder 2, %s14
      // Predicated region
      $region45: #{tpu_custom_call.1} parent=5 // pred_check
        %p2623 = pneg %p2622
      $region46: #{tpu_custom_call.1} parent=5 // pred_check_branch
        %2625 = sbr.rel (%p2623) target = $region48
      $region47: #{tpu_custom_call.1} parent=5 // pred_region
        %s2626 = ssub.s32 %s14, 2
        // Predicated region
        $region49: #{tpu_custom_call.1} parent=47 // pred_check
          %p2627 = pneg %p168
        $region50: #{tpu_custom_call.1} parent=47 // pred_check_branch
          %2629 = sbr.rel (%p2627) target = $region52
        $region51: #{tpu_custom_call.1} parent=47 // pred_region
          %s2630 = sand.u32 %s153, 1
          %s2631 = scalar_lea.sflag [#allocation3], %s2630
          %s2632 = sand.u32 %s153, 1
          %s2633 = scalar_lea.vmem [#allocation2], %s2632
          %2634 = dma.done %s2631, 16
        $region52: #{tpu_custom_call.1} parent=47 // pred_fallthru
          _
      $region48: #{tpu_custom_call.1} parent=5 // pred_fallthru
        _
    $region6: #{tpu_custom_call.1} parent=1 // loop_footer
      %s18 = sadd.s32 1, %s14
    $region7: #{tpu_custom_call.1} parent=1 // loop_footer_branch
      %13 = sbr.rel target = $region3
    $region8: #{tpu_custom_call.1} parent=1 // loop_exit
      _
    %2635 = vsyncpa [#allocation3], 1
    %s2636 = scalar_lea.sflag [#allocation3], 1
    %2637 = vsyncpa %s2636, 1

</llo_original>
